<compile_context>
chip_gen: v7x
topology: tpu7x:2x2x1
jax: 0.10.0
libtpu: 0.0.40
codegen_flags: <defaults>
</compile_context>

<pallas_src>
import jax
import jax.numpy as jnp
from jax.experimental import pallas as pl
from jax.experimental.pallas import tpu as pltpu

# ----------------------------- model config (small, consistent) -------------
VOCAB_OUT = 64          # output_size = len(int_to_vocab)
VOCAB_SIZE = VOCAB_OUT + 1
EMBEDDING_DIM = 32
HIDDEN_DIM = 32
N_LAYERS = 2
SEQ_LEN = 8
BATCH = 8


# ----------------------------- Pallas kernel --------------------------------
def _fused_rnn_kernel(x_ref, h0_ref, c0_ref,
                      wih0_ref, whh0_ref, b0_ref,
                      wih1_ref, whh1_ref, b1_ref,
                      wfc_ref, bfc_ref,
                      out_ref, hN_ref, cN_ref,
                      y0_sc):
    """Whole forward pass in one kernel.

    x_ref:  (T*B, E) time-major flat embedded inputs.
    h0/c0:  (n_layers, B, H) initial LSTM state.
    wih*:   (E|H, 4H), whh*: (H, 4H), b*: (1, 4H)   (gate order i,f,g,o;
            bias = b_ih + b_hh, as torch).
    wfc:    (H, O), bfc: (1, O).
    out:    (B, O) logits of the last timestep.
    hN/cN:  (n_layers, B, H) final LSTM state.
    y0_sc:  (T*B, H) VMEM scratch holding layer-0 hidden outputs (time-major).
    """
    H = HIDDEN_DIM
    G = 4 * H
    T = SEQ_LEN
    B = x_ref.shape[0] // T

    # ---- gate-lane constants, hoisted once (sigmoid-via-tanh folding) ------
    # i,f,o lanes: sigmoid(x) = 0.5*tanh(0.5*x) + 0.5 ; g lanes: tanh(x).
    lane_row = jax.lax.broadcasted_iota(jnp.int32, (1, G), 1)
    is_g_row = jnp.logical_and(lane_row >= 2 * H, lane_row < 3 * H)
    pre_row = jnp.where(is_g_row, 1.0, 0.5).astype(jnp.float32)   # fold into W

    lane_bh = jax.lax.broadcasted_iota(jnp.int32, (B, G), 1)
    is_g_bh = jnp.logical_and(lane_bh >= 2 * H, lane_bh < 3 * H)
    post_mul = jnp.where(is_g_bh, 1.0, 0.5).astype(jnp.float32)
    post_add = jnp.where(is_g_bh, 0.0, 0.5).astype(jnp.float32)

    def lstm_cell(xg_t, h, c, whh_s):
        # xg_t already holds pre-scaled (x_t @ W_ih + b); whh_s is pre-scaled
        # W_hh.  Only the hidden projection sits on the serial chain.
        gates = xg_t + jnp.dot(h, whh_s, preferred_element_type=jnp.float32)
        act = jnp.tanh(gates) * post_mul + post_add    # one full-vreg tanh
        i_g = act[:, 0 * H:1 * H]
        f_g = act[:, 1 * H:2 * H]
        g_g = act[:, 2 * H:3 * H]
        o_g = act[:, 3 * H:4 * H]
        c_new = f_g * c + i_g * g_g
        h_new = o_g * jnp.tanh(c_new)
        return h_new, c_new

    # ---------------- layer 0 ----------------
    # Hoisted input projection for all timesteps: one (T*B, E) @ (E, 4H) GEMM,
    # with the sigmoid pre-scale folded in.
    xg0 = (jnp.dot(x_ref[...], wih0_ref[...],
                   preferred_element_type=jnp.float32) + b0_ref[...]) * pre_row
    whh0_s = whh0_ref[...] * pre_row
    h = h0_ref[0].astype(jnp.float32)
    c = c0_ref[0].astype(jnp.float32)
    for t in range(T):                       # fully unrolled (T static)
        h, c = lstm_cell(xg0[t * B:(t + 1) * B, :], h, c, whh0_s)
        y0_sc[t * B:(t + 1) * B, :] = h
    hN_ref[0] = h.astype(hN_ref.dtype)
    cN_ref[0] = c.astype(cN_ref.dtype)

    # ---------------- layer 1 ----------------
    # TODO(synk): inter-layer LSTM dropout (p=0.5) and nn.Dropout(0.3) are
    # identity in eval/inference mode; training-mode dropout omitted.
    xg1 = (jnp.dot(y0_sc[...], wih1_ref[...],
                   preferred_element_type=jnp.float32) + b1_ref[...]) * pre_row
    whh1_s = whh1_ref[...] * pre_row
    h = h0_ref[1].astype(jnp.float32)
    c = c0_ref[1].astype(jnp.float32)
    for t in range(T):
        h, c = lstm_cell(xg1[t * B:(t + 1) * B, :], h, c, whh1_s)
    hN_ref[1] = h.astype(hN_ref.dtype)
    cN_ref[1] = c.astype(cN_ref.dtype)

    # ---------------- FC on the last timestep only ----------------
    out_ref[...] = (jnp.dot(h, wfc_ref[...],
                            preferred_element_type=jnp.float32)
                    + bfc_ref[...]).astype(out_ref.dtype)


# ----------------------------- wrappers --------------------------------------
@jax.jit
def _fused_forward(x_flat, h0_all, c0_all,
                   wih0, whh0, b0, wih1, whh1, b1, w_fc, b_fc):
    TB, _ = x_flat.shape
    B = TB // SEQ_LEN
    H = HIDDEN_DIM
    O = w_fc.shape[-1]
    return pl.pallas_call(
        _fused_rnn_kernel,
        out_shape=(
            jax.ShapeDtypeStruct((B, O), jnp.float32),            # logits
            jax.ShapeDtypeStruct((N_LAYERS, B, H), jnp.float32),  # h_n
            jax.ShapeDtypeStruct((N_LAYERS, B, H), jnp.float32),  # c_n
        ),
        scratch_shapes=[pltpu.VMEM((TB, H), jnp.float32)],        # layer-0 y
    )(x_flat, h0_all, c0_all,
      wih0, whh0, b0.reshape(1, 4 * HIDDEN_DIM),
      wih1, whh1, b1.reshape(1, 4 * HIDDEN_DIM),
      w_fc, b_fc.reshape(1, O))


def rnn_forward(params, nn_input, hidden):
    """nn_input: (B, T) int32 token ids.  hidden = (h0, c0), each (n_layers, B, H).

    Returns (out, (h_n, c_n)) with out: (B, output_size)."""
    h0_all, c0_all = hidden
    # Embedding lookup emitted directly in time-major flat (T*B, E) order —
    # the gather does the reordering, so no activation transpose is needed.
    flat_ids = jnp.transpose(nn_input).reshape(-1)             # (T*B,)
    x_flat = jnp.take(params["embedding"], flat_ids, axis=0)   # (T*B, E)
    out, h_n, c_n = _fused_forward(
        x_flat, h0_all, c0_all,
        params["w_ih_0"], params["w_hh_0"], params["b_0"],
        params["w_ih_1"], params["w_hh_1"], params["b_1"],
        params["w_fc"], params["b_fc"])
    return out, (h_n, c_n)


# ----------------------------- pure-JAX reference -----------------------------
def rnn_forward_ref(params, nn_input, hidden):
    h0_all, c0_all = hidden
    H = HIDDEN_DIM
    embeds = jnp.take(params["embedding"], nn_input, axis=0)   # (B, T, E)
    x = jnp.transpose(embeds, (1, 0, 2))                       # (T, B, E)
    h_fin, c_fin = [], []
    for layer in range(N_LAYERS):
        w_ih = params[f"w_ih_{layer}"]
        w_hh = params[f"w_hh_{layer}"]
        b = params[f"b_{layer}"]
        h = h0_all[layer]
        c = c0_all[layer]
        ys = []
        for t in range(SEQ_LEN):
            gates = x[t] @ w_ih + h @ w_hh + b
            i_g = jax.nn.sigmoid(gates[:, 0 * H:1 * H])
            f_g = jax.nn.sigmoid(gates[:, 1 * H:2 * H])
            g_g = jnp.tanh(gates[:, 2 * H:3 * H])
            o_g = jax.nn.sigmoid(gates[:, 3 * H:4 * H])
            c = f_g * c + i_g * g_g
            h = o_g * jnp.tanh(c)
            ys.append(h)
        x = jnp.stack(ys)
        h_fin.append(h)
        c_fin.append(c)
    out = x[-1] @ params["w_fc"] + params["b_fc"]
    return out, (jnp.stack(h_fin), jnp.stack(c_fin))


# ----------------------------- parameter init --------------------------------
def init_params(key):
    keys = jax.random.split(key, 4 + 3 * N_LAYERS)
    k = iter(keys)
    scale = 0.1
    params = {
        "embedding": jax.random.normal(next(k), (VOCAB_SIZE, EMBEDDING_DIM),
                                       jnp.float32) * scale,
        "w_fc": jax.random.normal(next(k), (HIDDEN_DIM, VOCAB_OUT),
                                  jnp.float32) * scale,
        "b_fc": jax.random.normal(next(k), (VOCAB_OUT,), jnp.float32) * scale,
    }
    in_dim = EMBEDDING_DIM
    for layer in range(N_LAYERS):
        # Stored transposed vs torch: (in, 4H) and (H, 4H); gate order i,f,g,o.
        params[f"w_ih_{layer}"] = jax.random.normal(
            next(k), (in_dim, 4 * HIDDEN_DIM), jnp.float32) * scale
        params[f"w_hh_{layer}"] = jax.random.normal(
            next(k), (HIDDEN_DIM, 4 * HIDDEN_DIM), jnp.float32) * scale
        params[f"b_{layer}"] = jax.random.normal(
            next(k), (4 * HIDDEN_DIM,), jnp.float32) * scale   # b_ih + b_hh
        in_dim = HIDDEN_DIM
    return params


# ----------------------------- main -------------------------------------------
if __name__ == "__main__":
    key = jax.random.PRNGKey(0)
    pkey, dkey = jax.random.split(key)

    params = init_params(pkey)
    tokens = jax.random.randint(dkey, (BATCH, SEQ_LEN), 0, VOCAB_SIZE,
                                dtype=jnp.int32)
    hidden = (jnp.zeros((N_LAYERS, BATCH, HIDDEN_DIM), jnp.float32),
              jnp.zeros((N_LAYERS, BATCH, HIDDEN_DIM), jnp.float32))

    out, (h_n, c_n) = rnn_forward(params, tokens, hidden)
    jax.block_until_ready((out, h_n, c_n))

    assert out.shape == (BATCH, VOCAB_OUT)
    assert h_n.shape == (N_LAYERS, BATCH, HIDDEN_DIM)
    assert c_n.shape == (N_LAYERS, BATCH, HIDDEN_DIM)

    # Numerical check against a pure-JAX reference of the same math.
    out_r, (h_r, c_r) = rnn_forward_ref(params, tokens, hidden)
    assert jnp.allclose(out, out_r, atol=2e-3, rtol=2e-3)
    assert jnp.allclose(h_n, h_r, atol=2e-3, rtol=2e-3)
    assert jnp.allclose(c_n, c_r, atol=2e-3, rtol=2e-3)

    print("KERNEL_OK")
</pallas_src>

<mosaic_0001>
module attributes {stable_mosaic.version = 11 : i64} {
  func.func @_fused_rnn_kernel(%arg0: memref<64x32xf32, #tpu.memory_space<vmem>>, %arg1: memref<2x8x32xf32, #tpu.memory_space<vmem>>, %arg2: memref<2x8x32xf32, #tpu.memory_space<vmem>>, %arg3: memref<32x128xf32, #tpu.memory_space<vmem>>, %arg4: memref<32x128xf32, #tpu.memory_space<vmem>>, %arg5: memref<1x128xf32, #tpu.memory_space<vmem>>, %arg6: memref<32x128xf32, #tpu.memory_space<vmem>>, %arg7: memref<32x128xf32, #tpu.memory_space<vmem>>, %arg8: memref<1x128xf32, #tpu.memory_space<vmem>>, %arg9: memref<32x64xf32, #tpu.memory_space<vmem>>, %arg10: memref<1x64xf32, #tpu.memory_space<vmem>>, %arg11: memref<8x64xf32, #tpu.memory_space<vmem>>, %arg12: memref<2x8x32xf32, #tpu.memory_space<vmem>>, %arg13: memref<2x8x32xf32, #tpu.memory_space<vmem>>, %arg14: memref<64x32xf32, #tpu.memory_space<vmem>>) attributes {dimension_semantics = [], scalar_prefetch = 0 : i64, scratch_operands = 1 : i64, tpu.core_type = #tpu.core_type<tc>} {
    %0 = tpu.iota {dimensions = array<i32: 1>} : vector<1x128xi32>
    %c64_i32 = arith.constant 64 : i32
    %1 = vector.broadcast %c64_i32 : i32 to vector<1x128xi32>
    %2 = arith.cmpi sge, %0, %1 : vector<1x128xi32>
    %c96_i32 = arith.constant 96 : i32
    %3 = vector.broadcast %c96_i32 : i32 to vector<1x128xi32>
    %4 = arith.cmpi slt, %0, %3 : vector<1x128xi32>
    %5 = arith.andi %2, %4 : vector<1x128xi1>
    %cst = arith.constant 1.000000e+00 : f32
    %cst_0 = arith.constant 5.000000e-01 : f32
    %6 = vector.broadcast %cst : f32 to vector<1x128xf32>
    %7 = vector.broadcast %cst_0 : f32 to vector<1x128xf32>
    %8 = arith.select %5, %6, %7 : vector<1x128xi1>, vector<1x128xf32>
    %9 = tpu.iota {dimensions = array<i32: 1>} : vector<8x128xi32>
    %c64_i32_1 = arith.constant 64 : i32
    %10 = vector.broadcast %c64_i32_1 : i32 to vector<8x128xi32>
    %11 = arith.cmpi sge, %9, %10 : vector<8x128xi32>
    %c96_i32_2 = arith.constant 96 : i32
    %12 = vector.broadcast %c96_i32_2 : i32 to vector<8x128xi32>
    %13 = arith.cmpi slt, %9, %12 : vector<8x128xi32>
    %14 = arith.andi %11, %13 : vector<8x128xi1>
    %cst_3 = arith.constant 1.000000e+00 : f32
    %cst_4 = arith.constant 5.000000e-01 : f32
    %15 = vector.broadcast %cst_3 : f32 to vector<8x128xf32>
    %16 = vector.broadcast %cst_4 : f32 to vector<8x128xf32>
    %17 = arith.select %14, %15, %16 : vector<8x128xi1>, vector<8x128xf32>
    %cst_5 = arith.constant 0.000000e+00 : f32
    %cst_6 = arith.constant 5.000000e-01 : f32
    %18 = vector.broadcast %cst_5 : f32 to vector<8x128xf32>
    %19 = vector.broadcast %cst_6 : f32 to vector<8x128xf32>
    %20 = arith.select %14, %18, %19 : vector<8x128xi1>, vector<8x128xf32>
    %c0 = arith.constant 0 : index
    %c0_7 = arith.constant 0 : index
    %21 = vector.load %arg0[%c0, %c0_7] : memref<64x32xf32, #tpu.memory_space<vmem>>, vector<64x32xf32>
    %c0_8 = arith.constant 0 : index
    %c0_9 = arith.constant 0 : index
    %22 = vector.load %arg3[%c0_8, %c0_9] : memref<32x128xf32, #tpu.memory_space<vmem>>, vector<32x128xf32>
    %cst_10 = arith.constant dense<0.000000e+00> : vector<64x128xf32>
    %23 = tpu.matmul %21, %22, %cst_10 {dimension_numbers = #tpu.dot_dimension_numbers<[1], [0], [0], [1], [0, 0, 1, 1], [], []>} : vector<64x32xf32>, vector<32x128xf32>, vector<64x128xf32> -> vector<64x128xf32>
    %c0_11 = arith.constant 0 : index
    %c0_12 = arith.constant 0 : index
    %24 = vector.load %arg5[%c0_11, %c0_12] : memref<1x128xf32, #tpu.memory_space<vmem>>, vector<1x128xf32>
    %25 = vector.broadcast %24 : vector<1x128xf32> to vector<64x128xf32>
    %26 = arith.addf %23, %25 : vector<64x128xf32>
    %27 = vector.broadcast %8 : vector<1x128xf32> to vector<64x128xf32>
    %28 = arith.mulf %26, %27 : vector<64x128xf32>
    %c0_13 = arith.constant 0 : index
    %c0_14 = arith.constant 0 : index
    %29 = vector.load %arg4[%c0_13, %c0_14] : memref<32x128xf32, #tpu.memory_space<vmem>>, vector<32x128xf32>
    %30 = vector.broadcast %8 : vector<1x128xf32> to vector<32x128xf32>
    %31 = arith.mulf %29, %30 : vector<32x128xf32>
    %c0_15 = arith.constant 0 : index
    %c0_16 = arith.constant 0 : index
    %c0_17 = arith.constant 0 : index
    %32 = vector.load %arg1[%c0_15, %c0_16, %c0_17] : memref<2x8x32xf32, #tpu.memory_space<vmem>>, vector<1x8x32xf32>
    %33 = vector.shape_cast %32 : vector<1x8x32xf32> to vector<8x32xf32>
    %c0_18 = arith.constant 0 : index
    %c0_19 = arith.constant 0 : index
    %c0_20 = arith.constant 0 : index
    %34 = vector.load %arg2[%c0_18, %c0_19, %c0_20] : memref<2x8x32xf32, #tpu.memory_space<vmem>>, vector<1x8x32xf32>
    %35 = vector.shape_cast %34 : vector<1x8x32xf32> to vector<8x32xf32>
    %36 = vector.extract_strided_slice %28 {offsets = [0, 0], sizes = [8, 128], strides = [1, 1]} : vector<64x128xf32> to vector<8x128xf32>
    %cst_21 = arith.constant dense<0.000000e+00> : vector<8x128xf32>
    %37 = tpu.matmul %33, %31, %cst_21 {dimension_numbers = #tpu.dot_dimension_numbers<[1], [0], [0], [1], [0, 0, 1, 1], [], []>} : vector<8x32xf32>, vector<32x128xf32>, vector<8x128xf32> -> vector<8x128xf32>
    %38 = arith.addf %36, %37 : vector<8x128xf32>
    %39 = math.tanh %38 : vector<8x128xf32>
    %40 = arith.mulf %39, %17 : vector<8x128xf32>
    %41 = arith.addf %40, %20 : vector<8x128xf32>
    %42 = vector.extract_strided_slice %41 {offsets = [0, 0], sizes = [8, 32], strides = [1, 1]} : vector<8x128xf32> to vector<8x32xf32>
    %43 = vector.extract_strided_slice %41 {offsets = [0, 32], sizes = [8, 32], strides = [1, 1]} : vector<8x128xf32> to vector<8x32xf32>
    %44 = vector.extract_strided_slice %41 {offsets = [0, 64], sizes = [8, 32], strides = [1, 1]} : vector<8x128xf32> to vector<8x32xf32>
    %45 = vector.extract_strided_slice %41 {offsets = [0, 96], sizes = [8, 32], strides = [1, 1]} : vector<8x128xf32> to vector<8x32xf32>
    %46 = arith.mulf %43, %35 : vector<8x32xf32>
    %47 = arith.mulf %42, %44 : vector<8x32xf32>
    %48 = arith.addf %46, %47 : vector<8x32xf32>
    %49 = math.tanh %48 : vector<8x32xf32>
    %50 = arith.mulf %45, %49 : vector<8x32xf32>
    %c0_22 = arith.constant 0 : index
    %c0_23 = arith.constant 0 : index
    %51 = vector.load %arg14[%c0_22, %c0_23] : memref<64x32xf32, #tpu.memory_space<vmem>>, vector<8x32xf32>
    tpu.vector_store %arg14[%c0_22, %c0_23], %50 {strides = array<i32>} : memref<64x32xf32, #tpu.memory_space<vmem>>, vector<8x32xf32>,
    %52 = vector.extract_strided_slice %28 {offsets = [8, 0], sizes = [8, 128], strides = [1, 1]} : vector<64x128xf32> to vector<8x128xf32>
    %cst_24 = arith.constant dense<0.000000e+00> : vector<8x128xf32>
    %53 = tpu.matmul %50, %31, %cst_24 {dimension_numbers = #tpu.dot_dimension_numbers<[1], [0], [0], [1], [0, 0, 1, 1], [], []>} : vector<8x32xf32>, vector<32x128xf32>, vector<8x128xf32> -> vector<8x128xf32>
    %54 = arith.addf %52, %53 : vector<8x128xf32>
    %55 = math.tanh %54 : vector<8x128xf32>
    %56 = arith.mulf %55, %17 : vector<8x128xf32>
    %57 = arith.addf %56, %20 : vector<8x128xf32>
    %58 = vector.extract_strided_slice %57 {offsets = [0, 0], sizes = [8, 32], strides = [1, 1]} : vector<8x128xf32> to vector<8x32xf32>
    %59 = vector.extract_strided_slice %57 {offsets = [0, 32], sizes = [8, 32], strides = [1, 1]} : vector<8x128xf32> to vector<8x32xf32>
    %60 = vector.extract_strided_slice %57 {offsets = [0, 64], sizes = [8, 32], strides = [1, 1]} : vector<8x128xf32> to vector<8x32xf32>
    %61 = vector.extract_strided_slice %57 {offsets = [0, 96], sizes = [8, 32], strides = [1, 1]} : vector<8x128xf32> to vector<8x32xf32>
    %62 = arith.mulf %59, %48 : vector<8x32xf32>
    %63 = arith.mulf %58, %60 : vector<8x32xf32>
    %64 = arith.addf %62, %63 : vector<8x32xf32>
    %65 = math.tanh %64 : vector<8x32xf32>
    %66 = arith.mulf %61, %65 : vector<8x32xf32>
    %c8 = arith.constant 8 : index
    %c0_25 = arith.constant 0 : index
    %67 = vector.load %arg14[%c8, %c0_25] : memref<64x32xf32, #tpu.memory_space<vmem>>, vector<8x32xf32>
    tpu.vector_store %arg14[%c8, %c0_25], %66 {strides = array<i32>} : memref<64x32xf32, #tpu.memory_space<vmem>>, vector<8x32xf32>,
    %68 = vector.extract_strided_slice %28 {offsets = [16, 0], sizes = [8, 128], strides = [1, 1]} : vector<64x128xf32> to vector<8x128xf32>
    %cst_26 = arith.constant dense<0.000000e+00> : vector<8x128xf32>
    %69 = tpu.matmul %66, %31, %cst_26 {dimension_numbers = #tpu.dot_dimension_numbers<[1], [0], [0], [1], [0, 0, 1, 1], [], []>} : vector<8x32xf32>, vector<32x128xf32>, vector<8x128xf32> -> vector<8x128xf32>
    %70 = arith.addf %68, %69 : vector<8x128xf32>
    %71 = math.tanh %70 : vector<8x128xf32>
    %72 = arith.mulf %71, %17 : vector<8x128xf32>
    %73 = arith.addf %72, %20 : vector<8x128xf32>
    %74 = vector.extract_strided_slice %73 {offsets = [0, 0], sizes = [8, 32], strides = [1, 1]} : vector<8x128xf32> to vector<8x32xf32>
    %75 = vector.extract_strided_slice %73 {offsets = [0, 32], sizes = [8, 32], strides = [1, 1]} : vector<8x128xf32> to vector<8x32xf32>
    %76 = vector.extract_strided_slice %73 {offsets = [0, 64], sizes = [8, 32], strides = [1, 1]} : vector<8x128xf32> to vector<8x32xf32>
    %77 = vector.extract_strided_slice %73 {offsets = [0, 96], sizes = [8, 32], strides = [1, 1]} : vector<8x128xf32> to vector<8x32xf32>
    %78 = arith.mulf %75, %64 : vector<8x32xf32>
    %79 = arith.mulf %74, %76 : vector<8x32xf32>
    %80 = arith.addf %78, %79 : vector<8x32xf32>
    %81 = math.tanh %80 : vector<8x32xf32>
    %82 = arith.mulf %77, %81 : vector<8x32xf32>
    %c16 = arith.constant 16 : index
    %c0_27 = arith.constant 0 : index
    %83 = vector.load %arg14[%c16, %c0_27] : memref<64x32xf32, #tpu.memory_space<vmem>>, vector<8x32xf32>
    tpu.vector_store %arg14[%c16, %c0_27], %82 {strides = array<i32>} : memref<64x32xf32, #tpu.memory_space<vmem>>, vector<8x32xf32>,
    %84 = vector.extract_strided_slice %28 {offsets = [24, 0], sizes = [8, 128], strides = [1, 1]} : vector<64x128xf32> to vector<8x128xf32>
    %cst_28 = arith.constant dense<0.000000e+00> : vector<8x128xf32>
    %85 = tpu.matmul %82, %31, %cst_28 {dimension_numbers = #tpu.dot_dimension_numbers<[1], [0], [0], [1], [0, 0, 1, 1], [], []>} : vector<8x32xf32>, vector<32x128xf32>, vector<8x128xf32> -> vector<8x128xf32>
    %86 = arith.addf %84, %85 : vector<8x128xf32>
    %87 = math.tanh %86 : vector<8x128xf32>
    %88 = arith.mulf %87, %17 : vector<8x128xf32>
    %89 = arith.addf %88, %20 : vector<8x128xf32>
    %90 = vector.extract_strided_slice %89 {offsets = [0, 0], sizes = [8, 32], strides = [1, 1]} : vector<8x128xf32> to vector<8x32xf32>
    %91 = vector.extract_strided_slice %89 {offsets = [0, 32], sizes = [8, 32], strides = [1, 1]} : vector<8x128xf32> to vector<8x32xf32>
    %92 = vector.extract_strided_slice %89 {offsets = [0, 64], sizes = [8, 32], strides = [1, 1]} : vector<8x128xf32> to vector<8x32xf32>
    %93 = vector.extract_strided_slice %89 {offsets = [0, 96], sizes = [8, 32], strides = [1, 1]} : vector<8x128xf32> to vector<8x32xf32>
    %94 = arith.mulf %91, %80 : vector<8x32xf32>
    %95 = arith.mulf %90, %92 : vector<8x32xf32>
    %96 = arith.addf %94, %95 : vector<8x32xf32>
    %97 = math.tanh %96 : vector<8x32xf32>
    %98 = arith.mulf %93, %97 : vector<8x32xf32>
    %c24 = arith.constant 24 : index
    %c0_29 = arith.constant 0 : index
    %99 = vector.load %arg14[%c24, %c0_29] : memref<64x32xf32, #tpu.memory_space<vmem>>, vector<8x32xf32>
    tpu.vector_store %arg14[%c24, %c0_29], %98 {strides = array<i32>} : memref<64x32xf32, #tpu.memory_space<vmem>>, vector<8x32xf32>,
    %100 = vector.extract_strided_slice %28 {offsets = [32, 0], sizes = [8, 128], strides = [1, 1]} : vector<64x128xf32> to vector<8x128xf32>
    %cst_30 = arith.constant dense<0.000000e+00> : vector<8x128xf32>
    %101 = tpu.matmul %98, %31, %cst_30 {dimension_numbers = #tpu.dot_dimension_numbers<[1], [0], [0], [1], [0, 0, 1, 1], [], []>} : vector<8x32xf32>, vector<32x128xf32>, vector<8x128xf32> -> vector<8x128xf32>
    %102 = arith.addf %100, %101 : vector<8x128xf32>
    %103 = math.tanh %102 : vector<8x128xf32>
    %104 = arith.mulf %103, %17 : vector<8x128xf32>
    %105 = arith.addf %104, %20 : vector<8x128xf32>
    %106 = vector.extract_strided_slice %105 {offsets = [0, 0], sizes = [8, 32], strides = [1, 1]} : vector<8x128xf32> to vector<8x32xf32>
    %107 = vector.extract_strided_slice %105 {offsets = [0, 32], sizes = [8, 32], strides = [1, 1]} : vector<8x128xf32> to vector<8x32xf32>
    %108 = vector.extract_strided_slice %105 {offsets = [0, 64], sizes = [8, 32], strides = [1, 1]} : vector<8x128xf32> to vector<8x32xf32>
    %109 = vector.extract_strided_slice %105 {offsets = [0, 96], sizes = [8, 32], strides = [1, 1]} : vector<8x128xf32> to vector<8x32xf32>
    %110 = arith.mulf %107, %96 : vector<8x32xf32>
    %111 = arith.mulf %106, %108 : vector<8x32xf32>
    %112 = arith.addf %110, %111 : vector<8x32xf32>
    %113 = math.tanh %112 : vector<8x32xf32>
    %114 = arith.mulf %109, %113 : vector<8x32xf32>
    %c32 = arith.constant 32 : index
    %c0_31 = arith.constant 0 : index
    %115 = vector.load %arg14[%c32, %c0_31] : memref<64x32xf32, #tpu.memory_space<vmem>>, vector<8x32xf32>
    tpu.vector_store %arg14[%c32, %c0_31], %114 {strides = array<i32>} : memref<64x32xf32, #tpu.memory_space<vmem>>, vector<8x32xf32>,
    %116 = vector.extract_strided_slice %28 {offsets = [40, 0], sizes = [8, 128], strides = [1, 1]} : vector<64x128xf32> to vector<8x128xf32>
    %cst_32 = arith.constant dense<0.000000e+00> : vector<8x128xf32>
    %117 = tpu.matmul %114, %31, %cst_32 {dimension_numbers = #tpu.dot_dimension_numbers<[1], [0], [0], [1], [0, 0, 1, 1], [], []>} : vector<8x32xf32>, vector<32x128xf32>, vector<8x128xf32> -> vector<8x128xf32>
    %118 = arith.addf %116, %117 : vector<8x128xf32>
    %119 = math.tanh %118 : vector<8x128xf32>
    %120 = arith.mulf %119, %17 : vector<8x128xf32>
    %121 = arith.addf %120, %20 : vector<8x128xf32>
    %122 = vector.extract_strided_slice %121 {offsets = [0, 0], sizes = [8, 32], strides = [1, 1]} : vector<8x128xf32> to vector<8x32xf32>
    %123 = vector.extract_strided_slice %121 {offsets = [0, 32], sizes = [8, 32], strides = [1, 1]} : vector<8x128xf32> to vector<8x32xf32>
    %124 = vector.extract_strided_slice %121 {offsets = [0, 64], sizes = [8, 32], strides = [1, 1]} : vector<8x128xf32> to vector<8x32xf32>
    %125 = vector.extract_strided_slice %121 {offsets = [0, 96], sizes = [8, 32], strides = [1, 1]} : vector<8x128xf32> to vector<8x32xf32>
    %126 = arith.mulf %123, %112 : vector<8x32xf32>
    %127 = arith.mulf %122, %124 : vector<8x32xf32>
    %128 = arith.addf %126, %127 : vector<8x32xf32>
    %129 = math.tanh %128 : vector<8x32xf32>
    %130 = arith.mulf %125, %129 : vector<8x32xf32>
    %c40 = arith.constant 40 : index
    %c0_33 = arith.constant 0 : index
    %131 = vector.load %arg14[%c40, %c0_33] : memref<64x32xf32, #tpu.memory_space<vmem>>, vector<8x32xf32>
    tpu.vector_store %arg14[%c40, %c0_33], %130 {strides = array<i32>} : memref<64x32xf32, #tpu.memory_space<vmem>>, vector<8x32xf32>,
    %132 = vector.extract_strided_slice %28 {offsets = [48, 0], sizes = [8, 128], strides = [1, 1]} : vector<64x128xf32> to vector<8x128xf32>
    %cst_34 = arith.constant dense<0.000000e+00> : vector<8x128xf32>
    %133 = tpu.matmul %130, %31, %cst_34 {dimension_numbers = #tpu.dot_dimension_numbers<[1], [0], [0], [1], [0, 0, 1, 1], [], []>} : vector<8x32xf32>, vector<32x128xf32>, vector<8x128xf32> -> vector<8x128xf32>
    %134 = arith.addf %132, %133 : vector<8x128xf32>
    %135 = math.tanh %134 : vector<8x128xf32>
    %136 = arith.mulf %135, %17 : vector<8x128xf32>
    %137 = arith.addf %136, %20 : vector<8x128xf32>
    %138 = vector.extract_strided_slice %137 {offsets = [0, 0], sizes = [8, 32], strides = [1, 1]} : vector<8x128xf32> to vector<8x32xf32>
    %139 = vector.extract_strided_slice %137 {offsets = [0, 32], sizes = [8, 32], strides = [1, 1]} : vector<8x128xf32> to vector<8x32xf32>
    %140 = vector.extract_strided_slice %137 {offsets = [0, 64], sizes = [8, 32], strides = [1, 1]} : vector<8x128xf32> to vector<8x32xf32>
    %141 = vector.extract_strided_slice %137 {offsets = [0, 96], sizes = [8, 32], strides = [1, 1]} : vector<8x128xf32> to vector<8x32xf32>
    %142 = arith.mulf %139, %128 : vector<8x32xf32>
    %143 = arith.mulf %138, %140 : vector<8x32xf32>
    %144 = arith.addf %142, %143 : vector<8x32xf32>
    %145 = math.tanh %144 : vector<8x32xf32>
    %146 = arith.mulf %141, %145 : vector<8x32xf32>
    %c48 = arith.constant 48 : index
    %c0_35 = arith.constant 0 : index
    %147 = vector.load %arg14[%c48, %c0_35] : memref<64x32xf32, #tpu.memory_space<vmem>>, vector<8x32xf32>
    tpu.vector_store %arg14[%c48, %c0_35], %146 {strides = array<i32>} : memref<64x32xf32, #tpu.memory_space<vmem>>, vector<8x32xf32>,
    %148 = vector.extract_strided_slice %28 {offsets = [56, 0], sizes = [8, 128], strides = [1, 1]} : vector<64x128xf32> to vector<8x128xf32>
    %cst_36 = arith.constant dense<0.000000e+00> : vector<8x128xf32>
    %149 = tpu.matmul %146, %31, %cst_36 {dimension_numbers = #tpu.dot_dimension_numbers<[1], [0], [0], [1], [0, 0, 1, 1], [], []>} : vector<8x32xf32>, vector<32x128xf32>, vector<8x128xf32> -> vector<8x128xf32>
    %150 = arith.addf %148, %149 : vector<8x128xf32>
    %151 = math.tanh %150 : vector<8x128xf32>
    %152 = arith.mulf %151, %17 : vector<8x128xf32>
    %153 = arith.addf %152, %20 : vector<8x128xf32>
    %154 = vector.extract_strided_slice %153 {offsets = [0, 0], sizes = [8, 32], strides = [1, 1]} : vector<8x128xf32> to vector<8x32xf32>
    %155 = vector.extract_strided_slice %153 {offsets = [0, 32], sizes = [8, 32], strides = [1, 1]} : vector<8x128xf32> to vector<8x32xf32>
    %156 = vector.extract_strided_slice %153 {offsets = [0, 64], sizes = [8, 32], strides = [1, 1]} : vector<8x128xf32> to vector<8x32xf32>
    %157 = vector.extract_strided_slice %153 {offsets = [0, 96], sizes = [8, 32], strides = [1, 1]} : vector<8x128xf32> to vector<8x32xf32>
    %158 = arith.mulf %155, %144 : vector<8x32xf32>
    %159 = arith.mulf %154, %156 : vector<8x32xf32>
    %160 = arith.addf %158, %159 : vector<8x32xf32>
    %161 = math.tanh %160 : vector<8x32xf32>
    %162 = arith.mulf %157, %161 : vector<8x32xf32>
    %c56 = arith.constant 56 : index
    %c0_37 = arith.constant 0 : index
    %163 = vector.load %arg14[%c56, %c0_37] : memref<64x32xf32, #tpu.memory_space<vmem>>, vector<8x32xf32>
    tpu.vector_store %arg14[%c56, %c0_37], %162 {strides = array<i32>} : memref<64x32xf32, #tpu.memory_space<vmem>>, vector<8x32xf32>,
    %c0_38 = arith.constant 0 : index
    %c0_39 = arith.constant 0 : index
    %c0_40 = arith.constant 0 : index
    %164 = vector.load %arg12[%c0_38, %c0_39, %c0_40] : memref<2x8x32xf32, #tpu.memory_space<vmem>>, vector<1x8x32xf32>
    %165 = vector.shape_cast %164 : vector<1x8x32xf32> to vector<8x32xf32>
    %166 = vector.shape_cast %162 : vector<8x32xf32> to vector<1x8x32xf32>
    tpu.vector_store %arg12[%c0_38, %c0_39, %c0_40], %166 {strides = array<i32>} : memref<2x8x32xf32, #tpu.memory_space<vmem>>, vector<1x8x32xf32>,
    %c0_41 = arith.constant 0 : index
    %c0_42 = arith.constant 0 : index
    %c0_43 = arith.constant 0 : index
    %167 = vector.load %arg13[%c0_41, %c0_42, %c0_43] : memref<2x8x32xf32, #tpu.memory_space<vmem>>, vector<1x8x32xf32>
    %168 = vector.shape_cast %167 : vector<1x8x32xf32> to vector<8x32xf32>
    %169 = vector.shape_cast %160 : vector<8x32xf32> to vector<1x8x32xf32>
    tpu.vector_store %arg13[%c0_41, %c0_42, %c0_43], %169 {strides = array<i32>} : memref<2x8x32xf32, #tpu.memory_space<vmem>>, vector<1x8x32xf32>,
    %c0_44 = arith.constant 0 : index
    %c0_45 = arith.constant 0 : index
    %170 = vector.load %arg14[%c0_44, %c0_45] : memref<64x32xf32, #tpu.memory_space<vmem>>, vector<64x32xf32>
    %c0_46 = arith.constant 0 : index
    %c0_47 = arith.constant 0 : index
    %171 = vector.load %arg6[%c0_46, %c0_47] : memref<32x128xf32, #tpu.memory_space<vmem>>, vector<32x128xf32>
    %cst_48 = arith.constant dense<0.000000e+00> : vector<64x128xf32>
    %172 = tpu.matmul %170, %171, %cst_48 {dimension_numbers = #tpu.dot_dimension_numbers<[1], [0], [0], [1], [0, 0, 1, 1], [], []>} : vector<64x32xf32>, vector<32x128xf32>, vector<64x128xf32> -> vector<64x128xf32>
    %c0_49 = arith.constant 0 : index
    %c0_50 = arith.constant 0 : index
    %173 = vector.load %arg8[%c0_49, %c0_50] : memref<1x128xf32, #tpu.memory_space<vmem>>, vector<1x128xf32>
    %174 = vector.broadcast %173 : vector<1x128xf32> to vector<64x128xf32>
    %175 = arith.addf %172, %174 : vector<64x128xf32>
    %176 = vector.broadcast %8 : vector<1x128xf32> to vector<64x128xf32>
    %177 = arith.mulf %175, %176 : vector<64x128xf32>
    %c0_51 = arith.constant 0 : index
    %c0_52 = arith.constant 0 : index
    %178 = vector.load %arg7[%c0_51, %c0_52] : memref<32x128xf32, #tpu.memory_space<vmem>>, vector<32x128xf32>
    %179 = vector.broadcast %8 : vector<1x128xf32> to vector<32x128xf32>
    %180 = arith.mulf %178, %179 : vector<32x128xf32>
    %c1 = arith.constant 1 : index
    %c0_53 = arith.constant 0 : index
    %c0_54 = arith.constant 0 : index
    %181 = vector.load %arg1[%c1, %c0_53, %c0_54] : memref<2x8x32xf32, #tpu.memory_space<vmem>>, vector<1x8x32xf32>
    %182 = vector.shape_cast %181 : vector<1x8x32xf32> to vector<8x32xf32>
    %c1_55 = arith.constant 1 : index
    %c0_56 = arith.constant 0 : index
    %c0_57 = arith.constant 0 : index
    %183 = vector.load %arg2[%c1_55, %c0_56, %c0_57] : memref<2x8x32xf32, #tpu.memory_space<vmem>>, vector<1x8x32xf32>
    %184 = vector.shape_cast %183 : vector<1x8x32xf32> to vector<8x32xf32>
    %185 = vector.extract_strided_slice %177 {offsets = [0, 0], sizes = [8, 128], strides = [1, 1]} : vector<64x128xf32> to vector<8x128xf32>
    %cst_58 = arith.constant dense<0.000000e+00> : vector<8x128xf32>
    %186 = tpu.matmul %182, %180, %cst_58 {dimension_numbers = #tpu.dot_dimension_numbers<[1], [0], [0], [1], [0, 0, 1, 1], [], []>} : vector<8x32xf32>, vector<32x128xf32>, vector<8x128xf32> -> vector<8x128xf32>
    %187 = arith.addf %185, %186 : vector<8x128xf32>
    %188 = math.tanh %187 : vector<8x128xf32>
    %189 = arith.mulf %188, %17 : vector<8x128xf32>
    %190 = arith.addf %189, %20 : vector<8x128xf32>
    %191 = vector.extract_strided_slice %190 {offsets = [0, 0], sizes = [8, 32], strides = [1, 1]} : vector<8x128xf32> to vector<8x32xf32>
    %192 = vector.extract_strided_slice %190 {offsets = [0, 32], sizes = [8, 32], strides = [1, 1]} : vector<8x128xf32> to vector<8x32xf32>
    %193 = vector.extract_strided_slice %190 {offsets = [0, 64], sizes = [8, 32], strides = [1, 1]} : vector<8x128xf32> to vector<8x32xf32>
    %194 = vector.extract_strided_slice %190 {offsets = [0, 96], sizes = [8, 32], strides = [1, 1]} : vector<8x128xf32> to vector<8x32xf32>
    %195 = arith.mulf %192, %184 : vector<8x32xf32>
    %196 = arith.mulf %191, %193 : vector<8x32xf32>
    %197 = arith.addf %195, %196 : vector<8x32xf32>
    %198 = math.tanh %197 : vector<8x32xf32>
    %199 = arith.mulf %194, %198 : vector<8x32xf32>
    %200 = vector.extract_strided_slice %177 {offsets = [8, 0], sizes = [8, 128], strides = [1, 1]} : vector<64x128xf32> to vector<8x128xf32>
    %cst_59 = arith.constant dense<0.000000e+00> : vector<8x128xf32>
    %201 = tpu.matmul %199, %180, %cst_59 {dimension_numbers = #tpu.dot_dimension_numbers<[1], [0], [0], [1], [0, 0, 1, 1], [], []>} : vector<8x32xf32>, vector<32x128xf32>, vector<8x128xf32> -> vector<8x128xf32>
    %202 = arith.addf %200, %201 : vector<8x128xf32>
    %203 = math.tanh %202 : vector<8x128xf32>
    %204 = arith.mulf %203, %17 : vector<8x128xf32>
    %205 = arith.addf %204, %20 : vector<8x128xf32>
    %206 = vector.extract_strided_slice %205 {offsets = [0, 0], sizes = [8, 32], strides = [1, 1]} : vector<8x128xf32> to vector<8x32xf32>
    %207 = vector.extract_strided_slice %205 {offsets = [0, 32], sizes = [8, 32], strides = [1, 1]} : vector<8x128xf32> to vector<8x32xf32>
    %208 = vector.extract_strided_slice %205 {offsets = [0, 64], sizes = [8, 32], strides = [1, 1]} : vector<8x128xf32> to vector<8x32xf32>
    %209 = vector.extract_strided_slice %205 {offsets = [0, 96], sizes = [8, 32], strides = [1, 1]} : vector<8x128xf32> to vector<8x32xf32>
    %210 = arith.mulf %207, %197 : vector<8x32xf32>
    %211 = arith.mulf %206, %208 : vector<8x32xf32>
    %212 = arith.addf %210, %211 : vector<8x32xf32>
    %213 = math.tanh %212 : vector<8x32xf32>
    %214 = arith.mulf %209, %213 : vector<8x32xf32>
    %215 = vector.extract_strided_slice %177 {offsets = [16, 0], sizes = [8, 128], strides = [1, 1]} : vector<64x128xf32> to vector<8x128xf32>
    %cst_60 = arith.constant dense<0.000000e+00> : vector<8x128xf32>
    %216 = tpu.matmul %214, %180, %cst_60 {dimension_numbers = #tpu.dot_dimension_numbers<[1], [0], [0], [1], [0, 0, 1, 1], [], []>} : vector<8x32xf32>, vector<32x128xf32>, vector<8x128xf32> -> vector<8x128xf32>
    %217 = arith.addf %215, %216 : vector<8x128xf32>
    %218 = math.tanh %217 : vector<8x128xf32>
    %219 = arith.mulf %218, %17 : vector<8x128xf32>
    %220 = arith.addf %219, %20 : vector<8x128xf32>
    %221 = vector.extract_strided_slice %220 {offsets = [0, 0], sizes = [8, 32], strides = [1, 1]} : vector<8x128xf32> to vector<8x32xf32>
    %222 = vector.extract_strided_slice %220 {offsets = [0, 32], sizes = [8, 32], strides = [1, 1]} : vector<8x128xf32> to vector<8x32xf32>
    %223 = vector.extract_strided_slice %220 {offsets = [0, 64], sizes = [8, 32], strides = [1, 1]} : vector<8x128xf32> to vector<8x32xf32>
    %224 = vector.extract_strided_slice %220 {offsets = [0, 96], sizes = [8, 32], strides = [1, 1]} : vector<8x128xf32> to vector<8x32xf32>
    %225 = arith.mulf %222, %212 : vector<8x32xf32>
    %226 = arith.mulf %221, %223 : vector<8x32xf32>
    %227 = arith.addf %225, %226 : vector<8x32xf32>
    %228 = math.tanh %227 : vector<8x32xf32>
    %229 = arith.mulf %224, %228 : vector<8x32xf32>
    %230 = vector.extract_strided_slice %177 {offsets = [24, 0], sizes = [8, 128], strides = [1, 1]} : vector<64x128xf32> to vector<8x128xf32>
    %cst_61 = arith.constant dense<0.000000e+00> : vector<8x128xf32>
    %231 = tpu.matmul %229, %180, %cst_61 {dimension_numbers = #tpu.dot_dimension_numbers<[1], [0], [0], [1], [0, 0, 1, 1], [], []>} : vector<8x32xf32>, vector<32x128xf32>, vector<8x128xf32> -> vector<8x128xf32>
    %232 = arith.addf %230, %231 : vector<8x128xf32>
    %233 = math.tanh %232 : vector<8x128xf32>
    %234 = arith.mulf %233, %17 : vector<8x128xf32>
    %235 = arith.addf %234, %20 : vector<8x128xf32>
    %236 = vector.extract_strided_slice %235 {offsets = [0, 0], sizes = [8, 32], strides = [1, 1]} : vector<8x128xf32> to vector<8x32xf32>
    %237 = vector.extract_strided_slice %235 {offsets = [0, 32], sizes = [8, 32], strides = [1, 1]} : vector<8x128xf32> to vector<8x32xf32>
    %238 = vector.extract_strided_slice %235 {offsets = [0, 64], sizes = [8, 32], strides = [1, 1]} : vector<8x128xf32> to vector<8x32xf32>
    %239 = vector.extract_strided_slice %235 {offsets = [0, 96], sizes = [8, 32], strides = [1, 1]} : vector<8x128xf32> to vector<8x32xf32>
    %240 = arith.mulf %237, %227 : vector<8x32xf32>
    %241 = arith.mulf %236, %238 : vector<8x32xf32>
    %242 = arith.addf %240, %241 : vector<8x32xf32>
    %243 = math.tanh %242 : vector<8x32xf32>
    %244 = arith.mulf %239, %243 : vector<8x32xf32>
    %245 = vector.extract_strided_slice %177 {offsets = [32, 0], sizes = [8, 128], strides = [1, 1]} : vector<64x128xf32> to vector<8x128xf32>
    %cst_62 = arith.constant dense<0.000000e+00> : vector<8x128xf32>
    %246 = tpu.matmul %244, %180, %cst_62 {dimension_numbers = #tpu.dot_dimension_numbers<[1], [0], [0], [1], [0, 0, 1, 1], [], []>} : vector<8x32xf32>, vector<32x128xf32>, vector<8x128xf32> -> vector<8x128xf32>
    %247 = arith.addf %245, %246 : vector<8x128xf32>
    %248 = math.tanh %247 : vector<8x128xf32>
    %249 = arith.mulf %248, %17 : vector<8x128xf32>
    %250 = arith.addf %249, %20 : vector<8x128xf32>
    %251 = vector.extract_strided_slice %250 {offsets = [0, 0], sizes = [8, 32], strides = [1, 1]} : vector<8x128xf32> to vector<8x32xf32>
    %252 = vector.extract_strided_slice %250 {offsets = [0, 32], sizes = [8, 32], strides = [1, 1]} : vector<8x128xf32> to vector<8x32xf32>
    %253 = vector.extract_strided_slice %250 {offsets = [0, 64], sizes = [8, 32], strides = [1, 1]} : vector<8x128xf32> to vector<8x32xf32>
    %254 = vector.extract_strided_slice %250 {offsets = [0, 96], sizes = [8, 32], strides = [1, 1]} : vector<8x128xf32> to vector<8x32xf32>
    %255 = arith.mulf %252, %242 : vector<8x32xf32>
    %256 = arith.mulf %251, %253 : vector<8x32xf32>
    %257 = arith.addf %255, %256 : vector<8x32xf32>
    %258 = math.tanh %257 : vector<8x32xf32>
    %259 = arith.mulf %254, %258 : vector<8x32xf32>
    %260 = vector.extract_strided_slice %177 {offsets = [40, 0], sizes = [8, 128], strides = [1, 1]} : vector<64x128xf32> to vector<8x128xf32>
    %cst_63 = arith.constant dense<0.000000e+00> : vector<8x128xf32>
    %261 = tpu.matmul %259, %180, %cst_63 {dimension_numbers = #tpu.dot_dimension_numbers<[1], [0], [0], [1], [0, 0, 1, 1], [], []>} : vector<8x32xf32>, vector<32x128xf32>, vector<8x128xf32> -> vector<8x128xf32>
    %262 = arith.addf %260, %261 : vector<8x128xf32>
    %263 = math.tanh %262 : vector<8x128xf32>
    %264 = arith.mulf %263, %17 : vector<8x128xf32>
    %265 = arith.addf %264, %20 : vector<8x128xf32>
    %266 = vector.extract_strided_slice %265 {offsets = [0, 0], sizes = [8, 32], strides = [1, 1]} : vector<8x128xf32> to vector<8x32xf32>
    %267 = vector.extract_strided_slice %265 {offsets = [0, 32], sizes = [8, 32], strides = [1, 1]} : vector<8x128xf32> to vector<8x32xf32>
    %268 = vector.extract_strided_slice %265 {offsets = [0, 64], sizes = [8, 32], strides = [1, 1]} : vector<8x128xf32> to vector<8x32xf32>
    %269 = vector.extract_strided_slice %265 {offsets = [0, 96], sizes = [8, 32], strides = [1, 1]} : vector<8x128xf32> to vector<8x32xf32>
    %270 = arith.mulf %267, %257 : vector<8x32xf32>
    %271 = arith.mulf %266, %268 : vector<8x32xf32>
    %272 = arith.addf %270, %271 : vector<8x32xf32>
    %273 = math.tanh %272 : vector<8x32xf32>
    %274 = arith.mulf %269, %273 : vector<8x32xf32>
    %275 = vector.extract_strided_slice %177 {offsets = [48, 0], sizes = [8, 128], strides = [1, 1]} : vector<64x128xf32> to vector<8x128xf32>
    %cst_64 = arith.constant dense<0.000000e+00> : vector<8x128xf32>
    %276 = tpu.matmul %274, %180, %cst_64 {dimension_numbers = #tpu.dot_dimension_numbers<[1], [0], [0], [1], [0, 0, 1, 1], [], []>} : vector<8x32xf32>, vector<32x128xf32>, vector<8x128xf32> -> vector<8x128xf32>
    %277 = arith.addf %275, %276 : vector<8x128xf32>
    %278 = math.tanh %277 : vector<8x128xf32>
    %279 = arith.mulf %278, %17 : vector<8x128xf32>
    %280 = arith.addf %279, %20 : vector<8x128xf32>
    %281 = vector.extract_strided_slice %280 {offsets = [0, 0], sizes = [8, 32], strides = [1, 1]} : vector<8x128xf32> to vector<8x32xf32>
    %282 = vector.extract_strided_slice %280 {offsets = [0, 32], sizes = [8, 32], strides = [1, 1]} : vector<8x128xf32> to vector<8x32xf32>
    %283 = vector.extract_strided_slice %280 {offsets = [0, 64], sizes = [8, 32], strides = [1, 1]} : vector<8x128xf32> to vector<8x32xf32>
    %284 = vector.extract_strided_slice %280 {offsets = [0, 96], sizes = [8, 32], strides = [1, 1]} : vector<8x128xf32> to vector<8x32xf32>
    %285 = arith.mulf %282, %272 : vector<8x32xf32>
    %286 = arith.mulf %281, %283 : vector<8x32xf32>
    %287 = arith.addf %285, %286 : vector<8x32xf32>
    %288 = math.tanh %287 : vector<8x32xf32>
    %289 = arith.mulf %284, %288 : vector<8x32xf32>
    %290 = vector.extract_strided_slice %177 {offsets = [56, 0], sizes = [8, 128], strides = [1, 1]} : vector<64x128xf32> to vector<8x128xf32>
    %cst_65 = arith.constant dense<0.000000e+00> : vector<8x128xf32>
    %291 = tpu.matmul %289, %180, %cst_65 {dimension_numbers = #tpu.dot_dimension_numbers<[1], [0], [0], [1], [0, 0, 1, 1], [], []>} : vector<8x32xf32>, vector<32x128xf32>, vector<8x128xf32> -> vector<8x128xf32>
    %292 = arith.addf %290, %291 : vector<8x128xf32>
    %293 = math.tanh %292 : vector<8x128xf32>
    %294 = arith.mulf %293, %17 : vector<8x128xf32>
    %295 = arith.addf %294, %20 : vector<8x128xf32>
    %296 = vector.extract_strided_slice %295 {offsets = [0, 0], sizes = [8, 32], strides = [1, 1]} : vector<8x128xf32> to vector<8x32xf32>
    %297 = vector.extract_strided_slice %295 {offsets = [0, 32], sizes = [8, 32], strides = [1, 1]} : vector<8x128xf32> to vector<8x32xf32>
    %298 = vector.extract_strided_slice %295 {offsets = [0, 64], sizes = [8, 32], strides = [1, 1]} : vector<8x128xf32> to vector<8x32xf32>
    %299 = vector.extract_strided_slice %295 {offsets = [0, 96], sizes = [8, 32], strides = [1, 1]} : vector<8x128xf32> to vector<8x32xf32>
    %300 = arith.mulf %297, %287 : vector<8x32xf32>
    %301 = arith.mulf %296, %298 : vector<8x32xf32>
    %302 = arith.addf %300, %301 : vector<8x32xf32>
    %303 = math.tanh %302 : vector<8x32xf32>
    %304 = arith.mulf %299, %303 : vector<8x32xf32>
    %c1_66 = arith.constant 1 : index
    %c0_67 = arith.constant 0 : index
    %c0_68 = arith.constant 0 : index
    %305 = vector.load %arg12[%c1_66, %c0_67, %c0_68] : memref<2x8x32xf32, #tpu.memory_space<vmem>>, vector<1x8x32xf32>
    %306 = vector.shape_cast %305 : vector<1x8x32xf32> to vector<8x32xf32>
    %307 = vector.shape_cast %304 : vector<8x32xf32> to vector<1x8x32xf32>
    tpu.vector_store %arg12[%c1_66, %c0_67, %c0_68], %307 {strides = array<i32>} : memref<2x8x32xf32, #tpu.memory_space<vmem>>, vector<1x8x32xf32>,
    %c1_69 = arith.constant 1 : index
    %c0_70 = arith.constant 0 : index
    %c0_71 = arith.constant 0 : index
    %308 = vector.load %arg13[%c1_69, %c0_70, %c0_71] : memref<2x8x32xf32, #tpu.memory_space<vmem>>, vector<1x8x32xf32>
    %309 = vector.shape_cast %308 : vector<1x8x32xf32> to vector<8x32xf32>
    %310 = vector.shape_cast %302 : vector<8x32xf32> to vector<1x8x32xf32>
    tpu.vector_store %arg13[%c1_69, %c0_70, %c0_71], %310 {strides = array<i32>} : memref<2x8x32xf32, #tpu.memory_space<vmem>>, vector<1x8x32xf32>,
    %c0_72 = arith.constant 0 : index
    %c0_73 = arith.constant 0 : index
    %311 = vector.load %arg9[%c0_72, %c0_73] : memref<32x64xf32, #tpu.memory_space<vmem>>, vector<32x64xf32>
    %cst_74 = arith.constant dense<0.000000e+00> : vector<8x64xf32>
    %312 = tpu.matmul %304, %311, %cst_74 {dimension_numbers = #tpu.dot_dimension_numbers<[1], [0], [0], [1], [0, 0, 1, 1], [], []>} : vector<8x32xf32>, vector<32x64xf32>, vector<8x64xf32> -> vector<8x64xf32>
    %c0_75 = arith.constant 0 : index
    %c0_76 = arith.constant 0 : index
    %313 = vector.load %arg10[%c0_75, %c0_76] : memref<1x64xf32, #tpu.memory_space<vmem>>, vector<1x64xf32>
    %314 = vector.broadcast %313 : vector<1x64xf32> to vector<8x64xf32>
    %315 = arith.addf %312, %314 : vector<8x64xf32>
    %c0_77 = arith.constant 0 : index
    %c0_78 = arith.constant 0 : index
    %316 = vector.load %arg11[%c0_77, %c0_78] : memref<8x64xf32, #tpu.memory_space<vmem>>, vector<8x64xf32>
    tpu.vector_store %arg11[%c0_77, %c0_78], %315 {strides = array<i32>} : memref<8x64xf32, #tpu.memory_space<vmem>>, vector<8x64xf32>,
    return
  }
}

</mosaic_0001>

<llo_original>
// kernel: _fused_forward.1
$region0: #{_fused_forward.1}
  #allocation0 [shape = 'u32[]', space=smem, size = 0x4, offset = 0x4, fixed_abs, tag = 'smem constant byte address 0x4 - core index']
  #allocation1 [shape = 'u32[144,128]{1,0:T(1,128)}', space=vmem, size = 0x12000, scoped, tag = 'internal scratch']
  #allocation2 [shape = 'f32[64,32]{1,0:T(8,128)}', space=vmem, size = 0x8000, scoped, tag = 'scratch operand']
  %s0 = inlined_call_operand.vmem [shape: f32[64,32], index: 0, kind: input, shape index: {}]
  %s1 = inlined_call_operand.hbm [shape: f32[2,8,32], index: 1, kind: input, shape index: {}]
  %s2 = inlined_call_operand.hbm [shape: f32[2,8,32], index: 2, kind: input, shape index: {}]
  %s3 = inlined_call_operand.vmem [shape: f32[32,128], index: 3, kind: input, shape index: {}]
  %s4 = inlined_call_operand.vmem [shape: f32[32,128], index: 4, kind: input, shape index: {}]
  %s5 = inlined_call_operand.vmem [shape: f32[1,128], index: 5, kind: input, shape index: {}]
  %s6 = inlined_call_operand.vmem [shape: f32[32,128], index: 6, kind: input, shape index: {}]
  %s7 = inlined_call_operand.vmem [shape: f32[32,128], index: 7, kind: input, shape index: {}]
  %s8 = inlined_call_operand.vmem [shape: f32[1,128], index: 8, kind: input, shape index: {}]
  %s9 = inlined_call_operand.hbm [shape: f32[32,64], index: 9, kind: input, shape index: {}]
  %s10 = inlined_call_operand.vmem [shape: f32[1,64], index: 10, kind: input, shape index: {}]
  %s11 = inlined_call_operand.hbm [shape: f32[8,64], index: 11, kind: output, shape index: {0}]
  %s12 = inlined_call_operand.hbm [shape: f32[2,8,32], index: 12, kind: output, shape index: {1}]
  %s13 = inlined_call_operand.hbm [shape: f32[2,8,32], index: 13, kind: output, shape index: {2}]
  %14 = xla_tuple %s11, %s12, %s13
  %s15 = sld [smem:[#allocation0]]
  $region82: #{_fused_forward.1} parent=0
    _
  %s17 = ssub.s32 1, %s15
  %s18 = scalar_select 0, %s17, %s15
  $region1: #{_fused_forward.1} parent=0
    #allocation3 [shape = 'u8[8192]{0}', space=vmem, size = 0x2000, scoped, tag = 'input window, operand 1, single buffered']
    #allocation4 [shape = 's32[1]{0}', space=sflag, size = 0x4, scoped, tag = 'scoped memory for _fused_forward.1']
    #allocation5 [shape = 's32[1]{0}', space=sflag, size = 0x4, scoped, tag = 'scoped memory for _fused_forward.1']
    #allocation6 [shape = 'u8[8192]{0}', space=vmem, size = 0x2000, scoped, tag = 'input window, operand 2, single buffered']
    #allocation7 [shape = 's32[1]{0}', space=sflag, size = 0x4, scoped, tag = 'scoped memory for _fused_forward.1']
    #allocation8 [shape = 'u8[16384]{0}', space=vmem, size = 0x4000, scoped, tag = 'input window, operand 9, single buffered']
    #allocation9 [shape = 'u8[4096]{0}', space=vmem, size = 0x1000, scoped, tag = 'output window, operand 0, single buffered']
    #allocation10 [shape = 'u8[8192]{0}', space=vmem, size = 0x2000, scoped, tag = 'output window, operand 1, single buffered']
    #allocation11 [shape = 's32[1]{0}', space=sflag, size = 0x4, scoped, tag = 'scoped memory for _fused_forward.1']
    #allocation12 [shape = 'u8[8192]{0}', space=vmem, size = 0x2000, scoped, tag = 'output window, operand 2, single buffered']
    %19 = vsyncpa [#allocation4], 0
    %20 = vsyncpa [#allocation7], 0
    %21 = vsyncpa [#allocation5], 0
    %22 = vsyncpa [#allocation11], 0
    // Predicated region
    $region2: #{_fused_forward.1} parent=1 // pred_check
      _
    $region3: #{_fused_forward.1} parent=1 // pred_check_branch
      %24 = sbr.rel (0) target = $region5
    $region4: #{_fused_forward.1} parent=1 // pred_region
      _
    $region5: #{_fused_forward.1} parent=1 // pred_fallthru
      _
    // Predicated region
    $region6: #{_fused_forward.1} parent=1 // pred_check
      _
    $region7: #{_fused_forward.1} parent=1 // pred_check_branch
      %26 = sbr.rel (0) target = $region9
    $region8: #{_fused_forward.1} parent=1 // pred_region
      %s28 = ssub.s32 256, 256
      %29 = vsyncadd [#allocation4], %s28
      %s30 = sshll.u32 [#allocation3], 4
      %s31 = int_to_ptr.vmem [resolvable:$true] %s30
      %36 = dma.hbm_to_vmem [thread:$0]  %s1, 256, %s31, [#allocation4], 128, 128, 8
    $region9: #{_fused_forward.1} parent=1 // pred_fallthru
      _
    // Predicated region
    $region10: #{_fused_forward.1} parent=1 // pred_check
      _
    $region11: #{_fused_forward.1} parent=1 // pred_check_branch
      %38 = sbr.rel (0) target = $region13
    $region12: #{_fused_forward.1} parent=1 // pred_region
      %s40 = ssub.s32 256, 256
      %41 = vsyncadd [#allocation7], %s40
      %s42 = sshll.u32 [#allocation6], 4
      %s43 = int_to_ptr.vmem [resolvable:$true] %s42
      %48 = dma.hbm_to_vmem [thread:$0]  %s2, 256, %s43, [#allocation7], 128, 128, 8
    $region13: #{_fused_forward.1} parent=1 // pred_fallthru
      _
    // Predicated region
    $region14: #{_fused_forward.1} parent=1 // pred_check
      _
    $region15: #{_fused_forward.1} parent=1 // pred_check_branch
      %50 = sbr.rel (0) target = $region17
    $region16: #{_fused_forward.1} parent=1 // pred_region
      _
    $region17: #{_fused_forward.1} parent=1 // pred_fallthru
      _
    // Predicated region
    $region18: #{_fused_forward.1} parent=1 // pred_check
      _
    $region19: #{_fused_forward.1} parent=1 // pred_check_branch
      %52 = sbr.rel (0) target = $region21
    $region20: #{_fused_forward.1} parent=1 // pred_region
      _
    $region21: #{_fused_forward.1} parent=1 // pred_fallthru
      _
    // Predicated region
    $region22: #{_fused_forward.1} parent=1 // pred_check
      _
    $region23: #{_fused_forward.1} parent=1 // pred_check_branch
      %54 = sbr.rel (0) target = $region25
    $region24: #{_fused_forward.1} parent=1 // pred_region
      _
    $region25: #{_fused_forward.1} parent=1 // pred_fallthru
      _
    // Predicated region
    $region26: #{_fused_forward.1} parent=1 // pred_check
      _
    $region27: #{_fused_forward.1} parent=1 // pred_check_branch
      %56 = sbr.rel (0) target = $region29
    $region28: #{_fused_forward.1} parent=1 // pred_region
      _
    $region29: #{_fused_forward.1} parent=1 // pred_fallthru
      _
    // Predicated region
    $region30: #{_fused_forward.1} parent=1 // pred_check
      _
    $region31: #{_fused_forward.1} parent=1 // pred_check_branch
      %58 = sbr.rel (0) target = $region33
    $region32: #{_fused_forward.1} parent=1 // pred_region
      _
    $region33: #{_fused_forward.1} parent=1 // pred_fallthru
      _
    // Predicated region
    $region34: #{_fused_forward.1} parent=1 // pred_check
      _
    $region35: #{_fused_forward.1} parent=1 // pred_check_branch
      %60 = sbr.rel (0) target = $region37
    $region36: #{_fused_forward.1} parent=1 // pred_region
      _
    $region37: #{_fused_forward.1} parent=1 // pred_fallthru
      _
    // Predicated region
    $region38: #{_fused_forward.1} parent=1 // pred_check
      _
    $region39: #{_fused_forward.1} parent=1 // pred_check_branch
      %62 = sbr.rel (0) target = $region41
    $region40: #{_fused_forward.1} parent=1 // pred_region
      %s64 = ssub.s32 512, 512
      %65 = vsyncadd [#allocation7], %s64
      %s66 = sshll.u32 [#allocation8], 4
      %s67 = int_to_ptr.vmem [resolvable:$true] %s66
      %72 = dma.hbm_to_vmem [thread:$0]  %s9, 512, %s67, [#allocation7], 128, 128, 8
    $region41: #{_fused_forward.1} parent=1 // pred_fallthru
      _
    // Predicated region
    $region42: #{_fused_forward.1} parent=1 // pred_check
      _
    $region43: #{_fused_forward.1} parent=1 // pred_check_branch
      %74 = sbr.rel (0) target = $region45
    $region44: #{_fused_forward.1} parent=1 // pred_region
      _
    $region45: #{_fused_forward.1} parent=1 // pred_fallthru
      _
    // Predicated region
    $region46: #{_fused_forward.1} parent=1 // pred_check
      _
    $region47: #{_fused_forward.1} parent=1 // pred_check_branch
      %76 = sbr.rel (0) target = $region49
    $region48: #{_fused_forward.1} parent=1 // pred_region
      %77 = dma.done [#allocation4], 256
    $region49: #{_fused_forward.1} parent=1 // pred_fallthru
      _
    // Predicated region
    $region50: #{_fused_forward.1} parent=1 // pred_check
      _
    $region51: #{_fused_forward.1} parent=1 // pred_check_branch
      %79 = sbr.rel (0) target = $region53
    $region52: #{_fused_forward.1} parent=1 // pred_region
      %80 = dma.done [#allocation7], 256
    $region53: #{_fused_forward.1} parent=1 // pred_fallthru
      _
    // Predicated region
    $region54: #{_fused_forward.1} parent=1 // pred_check
      _
    $region55: #{_fused_forward.1} parent=1 // pred_check_branch
      %82 = sbr.rel (0) target = $region57
    $region56: #{_fused_forward.1} parent=1 // pred_region
      %83 = dma.done [#allocation7], 512
    $region57: #{_fused_forward.1} parent=1 // pred_fallthru
      _
    %v84 = vlaneseq
    %v85 = vand.u32 %v84, 127
    %vm86 = vcmp.ge.s32.totalorder %v85, 64
    %vm87 = vcmp.lt.s32.totalorder %v85, 96
    %vm88 = vmand %vm86, %vm87
    %v89 = vsel %vm88, 1.0, 0.5
    %v90 = vsel %vm88, 0.0, 0.5
    %v91 = vld [vmem:[%s0] sm:$0xff]
    %v92 = vld [vmem:[%s0 + $0x8] sm:$0xff]
    %v93 = vld [vmem:[%s0 + $0x10] sm:$0xff]
    %v94 = vld [vmem:[%s0 + $0x18] sm:$0xff]
    %v95 = vld [vmem:[%s0 + $0x20] sm:$0xff]
    %v96 = vld [vmem:[%s0 + $0x28] sm:$0xff]
    %v97 = vld [vmem:[%s0 + $0x30] sm:$0xff]
    %v98 = vld [vmem:[%s0 + $0x38] sm:$0xff]
    %v99 = vld [vmem:[%s3] sm:$0xff]
    %v100 = vld [vmem:[%s3 + $0x8] sm:$0xff]
    %v101 = vld [vmem:[%s3 + $0x10] sm:$0xff]
    %v102 = vld [vmem:[%s3 + $0x18] sm:$0xff]
    %v103 = vld [vmem:[%s5] sm:$0x1]
    %v105 = vlaneseq
    %v106 = vshrl.u32 %v105, 7
    %v107 = vsub.s32 0, %v106
    %v108 = vrot.slane %v103, %v107
    %vm110 = vcmask 261120
    %v112 = vsel %vm110, %v91, 0
    %v115 = vsel %vm110, %v92, 0
    %v118 = vsel %vm110, %v93, 0
    %v121 = vsel %vm110, %v94, 0
    %v124 = vsel %vm110, %v95, 0
    %v127 = vsel %vm110, %v96, 0
    %v130 = vsel %vm110, %v97, 0
    %v133 = vsel %vm110, %v98, 0
    %135 = vmatprep.subr.mxu0 0.0
    %136 = vmatpush1.msra.mxu0 %v99
    %137 = vmatprep.subr.mxu0 0.0
    %138 = vmatpush1.msra.mxu0 %v100
    %139 = vmatprep.subr.mxu0 0.0
    %140 = vmatpush1.msra.mxu0 %v101
    %141 = vmatprep.subr.mxu0 0.0
    %142 = vmatpush1.msra.mxu0 %v102
    %143 = vmatprep.subr.mxu0 0.0
    %144 = vmatpush1.msra.mxu0 0.0
    %145 = vmatprep.subr.mxu0 0.0
    %146 = vmatpush1.msra.mxu0 0.0
    %147 = vmatprep.subr.mxu0 0.0
    %148 = vmatpush1.msra.mxu0 0.0
    %149 = vmatprep.subr.mxu0 0.0
    %150 = vmatpush1.msra.mxu0 0.0
    %151 = vmatprep.subr.mxu0 0.0
    %152 = vmatpush1.msra.mxu0 0.0
    %153 = vmatprep.subr.mxu0 0.0
    %154 = vmatpush1.msra.mxu0 0.0
    %155 = vmatprep.subr.mxu0 0.0
    %156 = vmatpush1.msra.mxu0 0.0
    %157 = vmatprep.subr.mxu0 0.0
    %158 = vmatpush1.msra.mxu0 0.0
    %159 = vmatprep.subr.mxu0 0.0
    %160 = vmatpush1.msra.mxu0 0.0
    %161 = vmatprep.subr.mxu0 0.0
    %162 = vmatpush1.msra.mxu0 0.0
    %163 = vmatprep.subr.mxu0 0.0
    %164 = vmatpush1.msra.mxu0 0.0
    %165 = vmatprep.subr.mxu0 0.0
    %166 = vmatpush1.msra.mxu0 0.0
    %167 = vmatprep.subr.mxu0 0.0
    %168 = vmatpush1.msra.mxu0 0.0
    %169 = vmatprep.subr.mxu0 0.0
    %170 = vmatpush1.msra.mxu0 0.0
    %171 = vmatprep.subr.mxu0 0.0
    %172 = vmatpush1.msra.mxu0 0.0
    %173 = vmatprep.subr.mxu0 0.0
    %174 = vmatpush1.msra.mxu0 0.0
    %175 = vmatprep.subr.mxu0 0.0
    %176 = vmatpush1.msra.mxu0 0.0
    %177 = vmatprep.subr.mxu0 0.0
    %178 = vmatpush1.msra.mxu0 0.0
    %179 = vmatprep.subr.mxu0 0.0
    %180 = vmatpush1.msra.mxu0 0.0
    %181 = vmatprep.subr.mxu0 0.0
    %182 = vmatpush1.msra.mxu0 0.0
    %183 = vmatprep.subr.mxu0 0.0
    %184 = vmatpush1.msra.mxu0 0.0
    %185 = vmatprep.subr.mxu0 0.0
    %186 = vmatpush1.msra.mxu0 0.0
    %187 = vmatprep.subr.mxu0 0.0
    %188 = vmatpush1.msra.mxu0 0.0
    %189 = vmatprep.subr.mxu0 0.0
    %190 = vmatpush1.msra.mxu0 0.0
    %191 = vmatprep.subr.mxu0 0.0
    %192 = vmatpush1.msra.mxu0 0.0
    %193 = vmatprep.subr.mxu0 0.0
    %194 = vmatpush1.msra.mxu0 0.0
    %195 = vmatprep.subr.mxu0 0.0
    %196 = vmatpush1.msra.mxu0 0.0
    %197 = vmatprep.subr.mxu0 0.0
    %198 = vmatpush1.msra.mxu0 0.0
    %199 = vmatprep.mubr.f32.mxu0 0.0
    %200 = vmatmul.mubr.f32.gmra.mrb[0].mxu0 %v112
    %v201 = vpop.f32.mrb[0].mxu0
    %v202 = vadd.f32 %v108, %v201
    %v203 = vpop.f32.mrb[0].mxu0
    %204 = vmatprep.mubr.f32.mxu0 0.0
    %205 = vmatmul.mubr.f32.gmra.mrb[0].mxu0 %v115
    %v206 = vpop.f32.mrb[0].mxu0
    %v207 = vadd.f32 %v108, %v206
    %v208 = vpop.f32.mrb[0].mxu0
    %209 = vmatprep.mubr.f32.mxu0 0.0
    %210 = vmatmul.mubr.f32.gmra.mrb[0].mxu0 %v118
    %v211 = vpop.f32.mrb[0].mxu0
    %v212 = vadd.f32 %v108, %v211
    %v213 = vpop.f32.mrb[0].mxu0
    %214 = vmatprep.mubr.f32.mxu0 0.0
    %215 = vmatmul.mubr.f32.gmra.mrb[0].mxu0 %v121
    %v216 = vpop.f32.mrb[0].mxu0
    %v217 = vadd.f32 %v108, %v216
    %v218 = vpop.f32.mrb[0].mxu0
    %219 = vmatprep.mubr.f32.mxu0 0.0
    %220 = vmatmul.mubr.f32.gmra.mrb[0].mxu0 %v124
    %v221 = vpop.f32.mrb[0].mxu0
    %v222 = vadd.f32 %v108, %v221
    %v223 = vpop.f32.mrb[0].mxu0
    %224 = vmatprep.mubr.f32.mxu0 0.0
    %225 = vmatmul.mubr.f32.gmra.mrb[0].mxu0 %v127
    %v226 = vpop.f32.mrb[0].mxu0
    %v227 = vadd.f32 %v108, %v226
    %v228 = vpop.f32.mrb[0].mxu0
    %229 = vmatprep.mubr.f32.mxu0 0.0
    %230 = vmatmul.mubr.f32.gmra.mrb[0].mxu0 %v130
    %v231 = vpop.f32.mrb[0].mxu0
    %v232 = vadd.f32 %v108, %v231
    %v233 = vpop.f32.mrb[0].mxu0
    %234 = vmatprep.mubr.f32.mxu0 0.0
    %235 = vmatmul.mubr.f32.gmra.mrb[0].mxu0 %v133
    %v236 = vpop.f32.mrb[0].mxu0
    %v237 = vadd.f32 %v108, %v236
    %v238 = vpop.f32.mrb[0].mxu0
    %239 = vdwg.mxu0
    %v240 = vmul.f32 %v202, %v89
    %v241 = vmul.f32 %v207, %v89
    %v242 = vmul.f32 %v212, %v89
    %v243 = vmul.f32 %v217, %v89
    %v244 = vmul.f32 %v222, %v89
    %v245 = vmul.f32 %v227, %v89
    %v246 = vmul.f32 %v232, %v89
    %v247 = vmul.f32 %v237, %v89
    %v248 = vld [vmem:[%s4] sm:$0xff]
    %v249 = vld [vmem:[%s4 + $0x8] sm:$0xff]
    %v250 = vld [vmem:[%s4 + $0x10] sm:$0xff]
    %v251 = vld [vmem:[%s4 + $0x18] sm:$0xff]
    %v252 = vmul.f32 %v248, %v89
    %v253 = vmul.f32 %v249, %v89
    %v254 = vmul.f32 %v250, %v89
    %v255 = vmul.f32 %v251, %v89
    %v256 = vld [vmem:[#allocation3] sm:$0xff]
    %v257 = vld [vmem:[#allocation6] sm:$0xff]
    %v259 = vsel %vm110, %v256, 0
    %261 = vmatprep.subr.mxu0 0.0
    %262 = vmatpush1.msra.mxu0 %v252
    %263 = vmatprep.subr.mxu0 0.0
    %264 = vmatpush1.msra.mxu0 %v253
    %265 = vmatprep.subr.mxu0 0.0
    %266 = vmatpush1.msra.mxu0 %v254
    %267 = vmatprep.subr.mxu0 0.0
    %268 = vmatpush1.msra.mxu0 %v255
    %269 = vmatprep.subr.mxu0 0.0
    %270 = vmatpush1.msra.mxu0 0.0
    %271 = vmatprep.subr.mxu0 0.0
    %272 = vmatpush1.msra.mxu0 0.0
    %273 = vmatprep.subr.mxu0 0.0
    %274 = vmatpush1.msra.mxu0 0.0
    %275 = vmatprep.subr.mxu0 0.0
    %276 = vmatpush1.msra.mxu0 0.0
    %277 = vmatprep.subr.mxu0 0.0
    %278 = vmatpush1.msra.mxu0 0.0
    %279 = vmatprep.subr.mxu0 0.0
    %280 = vmatpush1.msra.mxu0 0.0
    %281 = vmatprep.subr.mxu0 0.0
    %282 = vmatpush1.msra.mxu0 0.0
    %283 = vmatprep.subr.mxu0 0.0
    %284 = vmatpush1.msra.mxu0 0.0
    %285 = vmatprep.subr.mxu0 0.0
    %286 = vmatpush1.msra.mxu0 0.0
    %287 = vmatprep.subr.mxu0 0.0
    %288 = vmatpush1.msra.mxu0 0.0
    %289 = vmatprep.subr.mxu0 0.0
    %290 = vmatpush1.msra.mxu0 0.0
    %291 = vmatprep.subr.mxu0 0.0
    %292 = vmatpush1.msra.mxu0 0.0
    %293 = vmatprep.subr.mxu0 0.0
    %294 = vmatpush1.msra.mxu0 0.0
    %295 = vmatprep.subr.mxu0 0.0
    %296 = vmatpush1.msra.mxu0 0.0
    %297 = vmatprep.subr.mxu0 0.0
    %298 = vmatpush1.msra.mxu0 0.0
    %299 = vmatprep.subr.mxu0 0.0
    %300 = vmatpush1.msra.mxu0 0.0
    %301 = vmatprep.subr.mxu0 0.0
    %302 = vmatpush1.msra.mxu0 0.0
    %303 = vmatprep.subr.mxu0 0.0
    %304 = vmatpush1.msra.mxu0 0.0
    %305 = vmatprep.subr.mxu0 0.0
    %306 = vmatpush1.msra.mxu0 0.0
    %307 = vmatprep.subr.mxu0 0.0
    %308 = vmatpush1.msra.mxu0 0.0
    %309 = vmatprep.subr.mxu0 0.0
    %310 = vmatpush1.msra.mxu0 0.0
    %311 = vmatprep.subr.mxu0 0.0
    %312 = vmatpush1.msra.mxu0 0.0
    %313 = vmatprep.subr.mxu0 0.0
    %314 = vmatpush1.msra.mxu0 0.0
    %315 = vmatprep.subr.mxu0 0.0
    %316 = vmatpush1.msra.mxu0 0.0
    %317 = vmatprep.subr.mxu0 0.0
    %318 = vmatpush1.msra.mxu0 0.0
    %319 = vmatprep.subr.mxu0 0.0
    %320 = vmatpush1.msra.mxu0 0.0
    %321 = vmatprep.subr.mxu0 0.0
    %322 = vmatpush1.msra.mxu0 0.0
    %323 = vmatprep.subr.mxu0 0.0
    %324 = vmatpush1.msra.mxu0 0.0
    %325 = vmatprep.mubr.f32.mxu0 0.0
    %326 = vmatmul.mubr.f32.gmra.mrb[0].mxu0 %v259
    %v327 = vpop.f32.mrb[0].mxu0
    %v328 = vadd.f32 0.0, %v327
    %v329 = vpop.f32.mrb[0].mxu0
    %330 = vdwg.mxu0
    %v331 = vadd.f32 %v240, %v328
    %v332 = vtanh.pop %v331
    %v333 = vmul.f32 %v332, %v89
    %v334 = vadd.f32 %v333, %v90
    %336 = vrot.lane.b32.xlu0 %v257, 32
    %v337 = vpop.permute.xlu0 %336
    %v339 = vmul.f32 %v334, %v337
    %341 = vrot.lane.b32.xlu0 %v334, 64
    %v342 = vpop.permute.xlu0 %341
    %v344 = vmul.f32 %v334, %v342
    %346 = vrot.lane.b32.xlu0 %v344, 32
    %v347 = vpop.permute.xlu0 %346
    %v349 = vadd.f32 %v339, %v347
    %v350 = vtanh.pop %v349
    %352 = vrot.lane.b32.xlu0 %v350, 64
    %v353 = vpop.permute.xlu0 %352
    %v355 = vmul.f32 %v334, %v353
    %357 = vrot.lane.b32.xlu0 %v355, 32
    %v358 = vpop.permute.xlu0 %357
    %360 = vst.msk [vmem:[#allocation2] sm:$0xff] %vm110, %v358
    %v361 = vsel %vm110, %v358, 0
    %363 = vmatprep.subr.mxu0 0.0
    %364 = vmatpush1.msra.mxu0 %v252
    %365 = vmatprep.subr.mxu0 0.0
    %366 = vmatpush1.msra.mxu0 %v253
    %367 = vmatprep.subr.mxu0 0.0
    %368 = vmatpush1.msra.mxu0 %v254
    %369 = vmatprep.subr.mxu0 0.0
    %370 = vmatpush1.msra.mxu0 %v255
    %371 = vmatprep.subr.mxu0 0.0
    %372 = vmatpush1.msra.mxu0 0.0
    %373 = vmatprep.subr.mxu0 0.0
    %374 = vmatpush1.msra.mxu0 0.0
    %375 = vmatprep.subr.mxu0 0.0
    %376 = vmatpush1.msra.mxu0 0.0
    %377 = vmatprep.subr.mxu0 0.0
    %378 = vmatpush1.msra.mxu0 0.0
    %379 = vmatprep.subr.mxu0 0.0
    %380 = vmatpush1.msra.mxu0 0.0
    %381 = vmatprep.subr.mxu0 0.0
    %382 = vmatpush1.msra.mxu0 0.0
    %383 = vmatprep.subr.mxu0 0.0
    %384 = vmatpush1.msra.mxu0 0.0
    %385 = vmatprep.subr.mxu0 0.0
    %386 = vmatpush1.msra.mxu0 0.0
    %387 = vmatprep.subr.mxu0 0.0
    %388 = vmatpush1.msra.mxu0 0.0
    %389 = vmatprep.subr.mxu0 0.0
    %390 = vmatpush1.msra.mxu0 0.0
    %391 = vmatprep.subr.mxu0 0.0
    %392 = vmatpush1.msra.mxu0 0.0
    %393 = vmatprep.subr.mxu0 0.0
    %394 = vmatpush1.msra.mxu0 0.0
    %395 = vmatprep.subr.mxu0 0.0
    %396 = vmatpush1.msra.mxu0 0.0
    %397 = vmatprep.subr.mxu0 0.0
    %398 = vmatpush1.msra.mxu0 0.0
    %399 = vmatprep.subr.mxu0 0.0
    %400 = vmatpush1.msra.mxu0 0.0
    %401 = vmatprep.subr.mxu0 0.0
    %402 = vmatpush1.msra.mxu0 0.0
    %403 = vmatprep.subr.mxu0 0.0
    %404 = vmatpush1.msra.mxu0 0.0
    %405 = vmatprep.subr.mxu0 0.0
    %406 = vmatpush1.msra.mxu0 0.0
    %407 = vmatprep.subr.mxu0 0.0
    %408 = vmatpush1.msra.mxu0 0.0
    %409 = vmatprep.subr.mxu0 0.0
    %410 = vmatpush1.msra.mxu0 0.0
    %411 = vmatprep.subr.mxu0 0.0
    %412 = vmatpush1.msra.mxu0 0.0
    %413 = vmatprep.subr.mxu0 0.0
    %414 = vmatpush1.msra.mxu0 0.0
    %415 = vmatprep.subr.mxu0 0.0
    %416 = vmatpush1.msra.mxu0 0.0
    %417 = vmatprep.subr.mxu0 0.0
    %418 = vmatpush1.msra.mxu0 0.0
    %419 = vmatprep.subr.mxu0 0.0
    %420 = vmatpush1.msra.mxu0 0.0
    %421 = vmatprep.subr.mxu0 0.0
    %422 = vmatpush1.msra.mxu0 0.0
    %423 = vmatprep.subr.mxu0 0.0
    %424 = vmatpush1.msra.mxu0 0.0
    %425 = vmatprep.subr.mxu0 0.0
    %426 = vmatpush1.msra.mxu0 0.0
    %427 = vmatprep.mubr.f32.mxu0 0.0
    %428 = vmatmul.mubr.f32.gmra.mrb[0].mxu0 %v361
    %v429 = vpop.f32.mrb[0].mxu0
    %v430 = vadd.f32 0.0, %v429
    %v431 = vpop.f32.mrb[0].mxu0
    %432 = vdwg.mxu0
    %v433 = vadd.f32 %v241, %v430
    %v434 = vtanh.pop %v433
    %v435 = vmul.f32 %v434, %v89
    %v436 = vadd.f32 %v435, %v90
    %v437 = vmul.f32 %v436, %v349
    %439 = vrot.lane.b32.xlu0 %v436, 64
    %v440 = vpop.permute.xlu0 %439
    %v442 = vmul.f32 %v436, %v440
    %444 = vrot.lane.b32.xlu0 %v442, 32
    %v445 = vpop.permute.xlu0 %444
    %v447 = vadd.f32 %v437, %v445
    %v448 = vtanh.pop %v447
    %450 = vrot.lane.b32.xlu0 %v448, 64
    %v451 = vpop.permute.xlu0 %450
    %v453 = vmul.f32 %v436, %v451
    %455 = vrot.lane.b32.xlu0 %v453, 32
    %v456 = vpop.permute.xlu0 %455
    %458 = vst.msk [vmem:[#allocation2 + $0x8] sm:$0xff] %vm110, %v456
    %v459 = vsel %vm110, %v456, 0
    %461 = vmatprep.subr.mxu0 0.0
    %462 = vmatpush1.msra.mxu0 %v252
    %463 = vmatprep.subr.mxu0 0.0
    %464 = vmatpush1.msra.mxu0 %v253
    %465 = vmatprep.subr.mxu0 0.0
    %466 = vmatpush1.msra.mxu0 %v254
    %467 = vmatprep.subr.mxu0 0.0
    %468 = vmatpush1.msra.mxu0 %v255
    %469 = vmatprep.subr.mxu0 0.0
    %470 = vmatpush1.msra.mxu0 0.0
    %471 = vmatprep.subr.mxu0 0.0
    %472 = vmatpush1.msra.mxu0 0.0
    %473 = vmatprep.subr.mxu0 0.0
    %474 = vmatpush1.msra.mxu0 0.0
    %475 = vmatprep.subr.mxu0 0.0
    %476 = vmatpush1.msra.mxu0 0.0
    %477 = vmatprep.subr.mxu0 0.0
    %478 = vmatpush1.msra.mxu0 0.0
    %479 = vmatprep.subr.mxu0 0.0
    %480 = vmatpush1.msra.mxu0 0.0
    %481 = vmatprep.subr.mxu0 0.0
    %482 = vmatpush1.msra.mxu0 0.0
    %483 = vmatprep.subr.mxu0 0.0
    %484 = vmatpush1.msra.mxu0 0.0
    %485 = vmatprep.subr.mxu0 0.0
    %486 = vmatpush1.msra.mxu0 0.0
    %487 = vmatprep.subr.mxu0 0.0
    %488 = vmatpush1.msra.mxu0 0.0
    %489 = vmatprep.subr.mxu0 0.0
    %490 = vmatpush1.msra.mxu0 0.0
    %491 = vmatprep.subr.mxu0 0.0
    %492 = vmatpush1.msra.mxu0 0.0
    %493 = vmatprep.subr.mxu0 0.0
    %494 = vmatpush1.msra.mxu0 0.0
    %495 = vmatprep.subr.mxu0 0.0
    %496 = vmatpush1.msra.mxu0 0.0
    %497 = vmatprep.subr.mxu0 0.0
    %498 = vmatpush1.msra.mxu0 0.0
    %499 = vmatprep.subr.mxu0 0.0
    %500 = vmatpush1.msra.mxu0 0.0
    %501 = vmatprep.subr.mxu0 0.0
    %502 = vmatpush1.msra.mxu0 0.0
    %503 = vmatprep.subr.mxu0 0.0
    %504 = vmatpush1.msra.mxu0 0.0
    %505 = vmatprep.subr.mxu0 0.0
    %506 = vmatpush1.msra.mxu0 0.0
    %507 = vmatprep.subr.mxu0 0.0
    %508 = vmatpush1.msra.mxu0 0.0
    %509 = vmatprep.subr.mxu0 0.0
    %510 = vmatpush1.msra.mxu0 0.0
    %511 = vmatprep.subr.mxu0 0.0
    %512 = vmatpush1.msra.mxu0 0.0
    %513 = vmatprep.subr.mxu0 0.0
    %514 = vmatpush1.msra.mxu0 0.0
    %515 = vmatprep.subr.mxu0 0.0
    %516 = vmatpush1.msra.mxu0 0.0
    %517 = vmatprep.subr.mxu0 0.0
    %518 = vmatpush1.msra.mxu0 0.0
    %519 = vmatprep.subr.mxu0 0.0
    %520 = vmatpush1.msra.mxu0 0.0
    %521 = vmatprep.subr.mxu0 0.0
    %522 = vmatpush1.msra.mxu0 0.0
    %523 = vmatprep.subr.mxu0 0.0
    %524 = vmatpush1.msra.mxu0 0.0
    %525 = vmatprep.mubr.f32.mxu0 0.0
    %526 = vmatmul.mubr.f32.gmra.mrb[0].mxu0 %v459
    %v527 = vpop.f32.mrb[0].mxu0
    %v528 = vadd.f32 0.0, %v527
    %v529 = vpop.f32.mrb[0].mxu0
    %530 = vdwg.mxu0
    %v531 = vadd.f32 %v242, %v528
    %v532 = vtanh.pop %v531
    %v533 = vmul.f32 %v532, %v89
    %v534 = vadd.f32 %v533, %v90
    %v535 = vmul.f32 %v534, %v447
    %537 = vrot.lane.b32.xlu0 %v534, 64
    %v538 = vpop.permute.xlu0 %537
    %v540 = vmul.f32 %v534, %v538
    %542 = vrot.lane.b32.xlu0 %v540, 32
    %v543 = vpop.permute.xlu0 %542
    %v545 = vadd.f32 %v535, %v543
    %v546 = vtanh.pop %v545
    %548 = vrot.lane.b32.xlu0 %v546, 64
    %v549 = vpop.permute.xlu0 %548
    %v551 = vmul.f32 %v534, %v549
    %553 = vrot.lane.b32.xlu0 %v551, 32
    %v554 = vpop.permute.xlu0 %553
    %556 = vst.msk [vmem:[#allocation2 + $0x10] sm:$0xff] %vm110, %v554
    %v557 = vsel %vm110, %v554, 0
    %559 = vmatprep.subr.mxu0 0.0
    %560 = vmatpush1.msra.mxu0 %v252
    %561 = vmatprep.subr.mxu0 0.0
    %562 = vmatpush1.msra.mxu0 %v253
    %563 = vmatprep.subr.mxu0 0.0
    %564 = vmatpush1.msra.mxu0 %v254
    %565 = vmatprep.subr.mxu0 0.0
    %566 = vmatpush1.msra.mxu0 %v255
    %567 = vmatprep.subr.mxu0 0.0
    %568 = vmatpush1.msra.mxu0 0.0
    %569 = vmatprep.subr.mxu0 0.0
    %570 = vmatpush1.msra.mxu0 0.0
    %571 = vmatprep.subr.mxu0 0.0
    %572 = vmatpush1.msra.mxu0 0.0
    %573 = vmatprep.subr.mxu0 0.0
    %574 = vmatpush1.msra.mxu0 0.0
    %575 = vmatprep.subr.mxu0 0.0
    %576 = vmatpush1.msra.mxu0 0.0
    %577 = vmatprep.subr.mxu0 0.0
    %578 = vmatpush1.msra.mxu0 0.0
    %579 = vmatprep.subr.mxu0 0.0
    %580 = vmatpush1.msra.mxu0 0.0
    %581 = vmatprep.subr.mxu0 0.0
    %582 = vmatpush1.msra.mxu0 0.0
    %583 = vmatprep.subr.mxu0 0.0
    %584 = vmatpush1.msra.mxu0 0.0
    %585 = vmatprep.subr.mxu0 0.0
    %586 = vmatpush1.msra.mxu0 0.0
    %587 = vmatprep.subr.mxu0 0.0
    %588 = vmatpush1.msra.mxu0 0.0
    %589 = vmatprep.subr.mxu0 0.0
    %590 = vmatpush1.msra.mxu0 0.0
    %591 = vmatprep.subr.mxu0 0.0
    %592 = vmatpush1.msra.mxu0 0.0
    %593 = vmatprep.subr.mxu0 0.0
    %594 = vmatpush1.msra.mxu0 0.0
    %595 = vmatprep.subr.mxu0 0.0
    %596 = vmatpush1.msra.mxu0 0.0
    %597 = vmatprep.subr.mxu0 0.0
    %598 = vmatpush1.msra.mxu0 0.0
    %599 = vmatprep.subr.mxu0 0.0
    %600 = vmatpush1.msra.mxu0 0.0
    %601 = vmatprep.subr.mxu0 0.0
    %602 = vmatpush1.msra.mxu0 0.0
    %603 = vmatprep.subr.mxu0 0.0
    %604 = vmatpush1.msra.mxu0 0.0
    %605 = vmatprep.subr.mxu0 0.0
    %606 = vmatpush1.msra.mxu0 0.0
    %607 = vmatprep.subr.mxu0 0.0
    %608 = vmatpush1.msra.mxu0 0.0
    %609 = vmatprep.subr.mxu0 0.0
    %610 = vmatpush1.msra.mxu0 0.0
    %611 = vmatprep.subr.mxu0 0.0
    %612 = vmatpush1.msra.mxu0 0.0
    %613 = vmatprep.subr.mxu0 0.0
    %614 = vmatpush1.msra.mxu0 0.0
    %615 = vmatprep.subr.mxu0 0.0
    %616 = vmatpush1.msra.mxu0 0.0
    %617 = vmatprep.subr.mxu0 0.0
    %618 = vmatpush1.msra.mxu0 0.0
    %619 = vmatprep.subr.mxu0 0.0
    %620 = vmatpush1.msra.mxu0 0.0
    %621 = vmatprep.subr.mxu0 0.0
    %622 = vmatpush1.msra.mxu0 0.0
    %623 = vmatprep.mubr.f32.mxu0 0.0
    %624 = vmatmul.mubr.f32.gmra.mrb[0].mxu0 %v557
    %v625 = vpop.f32.mrb[0].mxu0
    %v626 = vadd.f32 0.0, %v625
    %v627 = vpop.f32.mrb[0].mxu0
    %628 = vdwg.mxu0
    %v629 = vadd.f32 %v243, %v626
    %v630 = vtanh.pop %v629
    %v631 = vmul.f32 %v630, %v89
    %v632 = vadd.f32 %v631, %v90
    %v633 = vmul.f32 %v632, %v545
    %635 = vrot.lane.b32.xlu0 %v632, 64
    %v636 = vpop.permute.xlu0 %635
    %v638 = vmul.f32 %v632, %v636
    %640 = vrot.lane.b32.xlu0 %v638, 32
    %v641 = vpop.permute.xlu0 %640
    %v643 = vadd.f32 %v633, %v641
    %v644 = vtanh.pop %v643
    %646 = vrot.lane.b32.xlu0 %v644, 64
    %v647 = vpop.permute.xlu0 %646
    %v649 = vmul.f32 %v632, %v647
    %651 = vrot.lane.b32.xlu0 %v649, 32
    %v652 = vpop.permute.xlu0 %651
    %654 = vst.msk [vmem:[#allocation2 + $0x18] sm:$0xff] %vm110, %v652
    %v655 = vsel %vm110, %v652, 0
    %657 = vmatprep.subr.mxu0 0.0
    %658 = vmatpush1.msra.mxu0 %v252
    %659 = vmatprep.subr.mxu0 0.0
    %660 = vmatpush1.msra.mxu0 %v253
    %661 = vmatprep.subr.mxu0 0.0
    %662 = vmatpush1.msra.mxu0 %v254
    %663 = vmatprep.subr.mxu0 0.0
    %664 = vmatpush1.msra.mxu0 %v255
    %665 = vmatprep.subr.mxu0 0.0
    %666 = vmatpush1.msra.mxu0 0.0
    %667 = vmatprep.subr.mxu0 0.0
    %668 = vmatpush1.msra.mxu0 0.0
    %669 = vmatprep.subr.mxu0 0.0
    %670 = vmatpush1.msra.mxu0 0.0
    %671 = vmatprep.subr.mxu0 0.0
    %672 = vmatpush1.msra.mxu0 0.0
    %673 = vmatprep.subr.mxu0 0.0
    %674 = vmatpush1.msra.mxu0 0.0
    %675 = vmatprep.subr.mxu0 0.0
    %676 = vmatpush1.msra.mxu0 0.0
    %677 = vmatprep.subr.mxu0 0.0
    %678 = vmatpush1.msra.mxu0 0.0
    %679 = vmatprep.subr.mxu0 0.0
    %680 = vmatpush1.msra.mxu0 0.0
    %681 = vmatprep.subr.mxu0 0.0
    %682 = vmatpush1.msra.mxu0 0.0
    %683 = vmatprep.subr.mxu0 0.0
    %684 = vmatpush1.msra.mxu0 0.0
    %685 = vmatprep.subr.mxu0 0.0
    %686 = vmatpush1.msra.mxu0 0.0
    %687 = vmatprep.subr.mxu0 0.0
    %688 = vmatpush1.msra.mxu0 0.0
    %689 = vmatprep.subr.mxu0 0.0
    %690 = vmatpush1.msra.mxu0 0.0
    %691 = vmatprep.subr.mxu0 0.0
    %692 = vmatpush1.msra.mxu0 0.0
    %693 = vmatprep.subr.mxu0 0.0
    %694 = vmatpush1.msra.mxu0 0.0
    %695 = vmatprep.subr.mxu0 0.0
    %696 = vmatpush1.msra.mxu0 0.0
    %697 = vmatprep.subr.mxu0 0.0
    %698 = vmatpush1.msra.mxu0 0.0
    %699 = vmatprep.subr.mxu0 0.0
    %700 = vmatpush1.msra.mxu0 0.0
    %701 = vmatprep.subr.mxu0 0.0
    %702 = vmatpush1.msra.mxu0 0.0
    %703 = vmatprep.subr.mxu0 0.0
    %704 = vmatpush1.msra.mxu0 0.0
    %705 = vmatprep.subr.mxu0 0.0
    %706 = vmatpush1.msra.mxu0 0.0
    %707 = vmatprep.subr.mxu0 0.0
    %708 = vmatpush1.msra.mxu0 0.0
    %709 = vmatprep.subr.mxu0 0.0
    %710 = vmatpush1.msra.mxu0 0.0
    %711 = vmatprep.subr.mxu0 0.0
    %712 = vmatpush1.msra.mxu0 0.0
    %713 = vmatprep.subr.mxu0 0.0
    %714 = vmatpush1.msra.mxu0 0.0
    %715 = vmatprep.subr.mxu0 0.0
    %716 = vmatpush1.msra.mxu0 0.0
    %717 = vmatprep.subr.mxu0 0.0
    %718 = vmatpush1.msra.mxu0 0.0
    %719 = vmatprep.subr.mxu0 0.0
    %720 = vmatpush1.msra.mxu0 0.0
    %721 = vmatprep.mubr.f32.mxu0 0.0
    %722 = vmatmul.mubr.f32.gmra.mrb[0].mxu0 %v655
    %v723 = vpop.f32.mrb[0].mxu0
    %v724 = vadd.f32 0.0, %v723
    %v725 = vpop.f32.mrb[0].mxu0
    %726 = vdwg.mxu0
    %v727 = vadd.f32 %v244, %v724
    %v728 = vtanh.pop %v727
    %v729 = vmul.f32 %v728, %v89
    %v730 = vadd.f32 %v729, %v90
    %v731 = vmul.f32 %v730, %v643
    %733 = vrot.lane.b32.xlu0 %v730, 64
    %v734 = vpop.permute.xlu0 %733
    %v736 = vmul.f32 %v730, %v734
    %738 = vrot.lane.b32.xlu0 %v736, 32
    %v739 = vpop.permute.xlu0 %738
    %v741 = vadd.f32 %v731, %v739
    %v742 = vtanh.pop %v741
    %744 = vrot.lane.b32.xlu0 %v742, 64
    %v745 = vpop.permute.xlu0 %744
    %v747 = vmul.f32 %v730, %v745
    %749 = vrot.lane.b32.xlu0 %v747, 32
    %v750 = vpop.permute.xlu0 %749
    %752 = vst.msk [vmem:[#allocation2 + $0x20] sm:$0xff] %vm110, %v750
    %v753 = vsel %vm110, %v750, 0
    %755 = vmatprep.subr.mxu0 0.0
    %756 = vmatpush1.msra.mxu0 %v252
    %757 = vmatprep.subr.mxu0 0.0
    %758 = vmatpush1.msra.mxu0 %v253
    %759 = vmatprep.subr.mxu0 0.0
    %760 = vmatpush1.msra.mxu0 %v254
    %761 = vmatprep.subr.mxu0 0.0
    %762 = vmatpush1.msra.mxu0 %v255
    %763 = vmatprep.subr.mxu0 0.0
    %764 = vmatpush1.msra.mxu0 0.0
    %765 = vmatprep.subr.mxu0 0.0
    %766 = vmatpush1.msra.mxu0 0.0
    %767 = vmatprep.subr.mxu0 0.0
    %768 = vmatpush1.msra.mxu0 0.0
    %769 = vmatprep.subr.mxu0 0.0
    %770 = vmatpush1.msra.mxu0 0.0
    %771 = vmatprep.subr.mxu0 0.0
    %772 = vmatpush1.msra.mxu0 0.0
    %773 = vmatprep.subr.mxu0 0.0
    %774 = vmatpush1.msra.mxu0 0.0
    %775 = vmatprep.subr.mxu0 0.0
    %776 = vmatpush1.msra.mxu0 0.0
    %777 = vmatprep.subr.mxu0 0.0
    %778 = vmatpush1.msra.mxu0 0.0
    %779 = vmatprep.subr.mxu0 0.0
    %780 = vmatpush1.msra.mxu0 0.0
    %781 = vmatprep.subr.mxu0 0.0
    %782 = vmatpush1.msra.mxu0 0.0
    %783 = vmatprep.subr.mxu0 0.0
    %784 = vmatpush1.msra.mxu0 0.0
    %785 = vmatprep.subr.mxu0 0.0
    %786 = vmatpush1.msra.mxu0 0.0
    %787 = vmatprep.subr.mxu0 0.0
    %788 = vmatpush1.msra.mxu0 0.0
    %789 = vmatprep.subr.mxu0 0.0
    %790 = vmatpush1.msra.mxu0 0.0
    %791 = vmatprep.subr.mxu0 0.0
    %792 = vmatpush1.msra.mxu0 0.0
    %793 = vmatprep.subr.mxu0 0.0
    %794 = vmatpush1.msra.mxu0 0.0
    %795 = vmatprep.subr.mxu0 0.0
    %796 = vmatpush1.msra.mxu0 0.0
    %797 = vmatprep.subr.mxu0 0.0
    %798 = vmatpush1.msra.mxu0 0.0
    %799 = vmatprep.subr.mxu0 0.0
    %800 = vmatpush1.msra.mxu0 0.0
    %801 = vmatprep.subr.mxu0 0.0
    %802 = vmatpush1.msra.mxu0 0.0
    %803 = vmatprep.subr.mxu0 0.0
    %804 = vmatpush1.msra.mxu0 0.0
    %805 = vmatprep.subr.mxu0 0.0
    %806 = vmatpush1.msra.mxu0 0.0
    %807 = vmatprep.subr.mxu0 0.0
    %808 = vmatpush1.msra.mxu0 0.0
    %809 = vmatprep.subr.mxu0 0.0
    %810 = vmatpush1.msra.mxu0 0.0
    %811 = vmatprep.subr.mxu0 0.0
    %812 = vmatpush1.msra.mxu0 0.0
    %813 = vmatprep.subr.mxu0 0.0
    %814 = vmatpush1.msra.mxu0 0.0
    %815 = vmatprep.subr.mxu0 0.0
    %816 = vmatpush1.msra.mxu0 0.0
    %817 = vmatprep.subr.mxu0 0.0
    %818 = vmatpush1.msra.mxu0 0.0
    %819 = vmatprep.mubr.f32.mxu0 0.0
    %820 = vmatmul.mubr.f32.gmra.mrb[0].mxu0 %v753
    %v821 = vpop.f32.mrb[0].mxu0
    %v822 = vadd.f32 0.0, %v821
    %v823 = vpop.f32.mrb[0].mxu0
    %824 = vdwg.mxu0
    %v825 = vadd.f32 %v245, %v822
    %v826 = vtanh.pop %v825
    %v827 = vmul.f32 %v826, %v89
    %v828 = vadd.f32 %v827, %v90
    %v829 = vmul.f32 %v828, %v741
    %831 = vrot.lane.b32.xlu0 %v828, 64
    %v832 = vpop.permute.xlu0 %831
    %v834 = vmul.f32 %v828, %v832
    %836 = vrot.lane.b32.xlu0 %v834, 32
    %v837 = vpop.permute.xlu0 %836
    %v839 = vadd.f32 %v829, %v837
    %v840 = vtanh.pop %v839
    %842 = vrot.lane.b32.xlu0 %v840, 64
    %v843 = vpop.permute.xlu0 %842
    %v845 = vmul.f32 %v828, %v843
    %847 = vrot.lane.b32.xlu0 %v845, 32
    %v848 = vpop.permute.xlu0 %847
    %850 = vst.msk [vmem:[#allocation2 + $0x28] sm:$0xff] %vm110, %v848
    %v851 = vsel %vm110, %v848, 0
    %853 = vmatprep.subr.mxu0 0.0
    %854 = vmatpush1.msra.mxu0 %v252
    %855 = vmatprep.subr.mxu0 0.0
    %856 = vmatpush1.msra.mxu0 %v253
    %857 = vmatprep.subr.mxu0 0.0
    %858 = vmatpush1.msra.mxu0 %v254
    %859 = vmatprep.subr.mxu0 0.0
    %860 = vmatpush1.msra.mxu0 %v255
    %861 = vmatprep.subr.mxu0 0.0
    %862 = vmatpush1.msra.mxu0 0.0
    %863 = vmatprep.subr.mxu0 0.0
    %864 = vmatpush1.msra.mxu0 0.0
    %865 = vmatprep.subr.mxu0 0.0
    %866 = vmatpush1.msra.mxu0 0.0
    %867 = vmatprep.subr.mxu0 0.0
    %868 = vmatpush1.msra.mxu0 0.0
    %869 = vmatprep.subr.mxu0 0.0
    %870 = vmatpush1.msra.mxu0 0.0
    %871 = vmatprep.subr.mxu0 0.0
    %872 = vmatpush1.msra.mxu0 0.0
    %873 = vmatprep.subr.mxu0 0.0
    %874 = vmatpush1.msra.mxu0 0.0
    %875 = vmatprep.subr.mxu0 0.0
    %876 = vmatpush1.msra.mxu0 0.0
    %877 = vmatprep.subr.mxu0 0.0
    %878 = vmatpush1.msra.mxu0 0.0
    %879 = vmatprep.subr.mxu0 0.0
    %880 = vmatpush1.msra.mxu0 0.0
    %881 = vmatprep.subr.mxu0 0.0
    %882 = vmatpush1.msra.mxu0 0.0
    %883 = vmatprep.subr.mxu0 0.0
    %884 = vmatpush1.msra.mxu0 0.0
    %885 = vmatprep.subr.mxu0 0.0
    %886 = vmatpush1.msra.mxu0 0.0
    %887 = vmatprep.subr.mxu0 0.0
    %888 = vmatpush1.msra.mxu0 0.0
    %889 = vmatprep.subr.mxu0 0.0
    %890 = vmatpush1.msra.mxu0 0.0
    %891 = vmatprep.subr.mxu0 0.0
    %892 = vmatpush1.msra.mxu0 0.0
    %893 = vmatprep.subr.mxu0 0.0
    %894 = vmatpush1.msra.mxu0 0.0
    %895 = vmatprep.subr.mxu0 0.0
    %896 = vmatpush1.msra.mxu0 0.0
    %897 = vmatprep.subr.mxu0 0.0
    %898 = vmatpush1.msra.mxu0 0.0
    %899 = vmatprep.subr.mxu0 0.0
    %900 = vmatpush1.msra.mxu0 0.0
    %901 = vmatprep.subr.mxu0 0.0
    %902 = vmatpush1.msra.mxu0 0.0
    %903 = vmatprep.subr.mxu0 0.0
    %904 = vmatpush1.msra.mxu0 0.0
    %905 = vmatprep.subr.mxu0 0.0
    %906 = vmatpush1.msra.mxu0 0.0
    %907 = vmatprep.subr.mxu0 0.0
    %908 = vmatpush1.msra.mxu0 0.0
    %909 = vmatprep.subr.mxu0 0.0
    %910 = vmatpush1.msra.mxu0 0.0
    %911 = vmatprep.subr.mxu0 0.0
    %912 = vmatpush1.msra.mxu0 0.0
    %913 = vmatprep.subr.mxu0 0.0
    %914 = vmatpush1.msra.mxu0 0.0
    %915 = vmatprep.subr.mxu0 0.0
    %916 = vmatpush1.msra.mxu0 0.0
    %917 = vmatprep.mubr.f32.mxu0 0.0
    %918 = vmatmul.mubr.f32.gmra.mrb[0].mxu0 %v851
    %v919 = vpop.f32.mrb[0].mxu0
    %v920 = vadd.f32 0.0, %v919
    %v921 = vpop.f32.mrb[0].mxu0
    %922 = vdwg.mxu0
    %v923 = vadd.f32 %v246, %v920
    %v924 = vtanh.pop %v923
    %v925 = vmul.f32 %v924, %v89
    %v926 = vadd.f32 %v925, %v90
    %v927 = vmul.f32 %v926, %v839
    %929 = vrot.lane.b32.xlu0 %v926, 64
    %v930 = vpop.permute.xlu0 %929
    %v932 = vmul.f32 %v926, %v930
    %934 = vrot.lane.b32.xlu0 %v932, 32
    %v935 = vpop.permute.xlu0 %934
    %v937 = vadd.f32 %v927, %v935
    %v938 = vtanh.pop %v937
    %940 = vrot.lane.b32.xlu0 %v938, 64
    %v941 = vpop.permute.xlu0 %940
    %v943 = vmul.f32 %v926, %v941
    %945 = vrot.lane.b32.xlu0 %v943, 32
    %v946 = vpop.permute.xlu0 %945
    %948 = vst.msk [vmem:[#allocation2 + $0x30] sm:$0xff] %vm110, %v946
    %v949 = vsel %vm110, %v946, 0
    %951 = vmatprep.subr.mxu0 0.0
    %952 = vmatpush1.msra.mxu0 %v252
    %953 = vmatprep.subr.mxu0 0.0
    %954 = vmatpush1.msra.mxu0 %v253
    %955 = vmatprep.subr.mxu0 0.0
    %956 = vmatpush1.msra.mxu0 %v254
    %957 = vmatprep.subr.mxu0 0.0
    %958 = vmatpush1.msra.mxu0 %v255
    %959 = vmatprep.subr.mxu0 0.0
    %960 = vmatpush1.msra.mxu0 0.0
    %961 = vmatprep.subr.mxu0 0.0
    %962 = vmatpush1.msra.mxu0 0.0
    %963 = vmatprep.subr.mxu0 0.0
    %964 = vmatpush1.msra.mxu0 0.0
    %965 = vmatprep.subr.mxu0 0.0
    %966 = vmatpush1.msra.mxu0 0.0
    %967 = vmatprep.subr.mxu0 0.0
    %968 = vmatpush1.msra.mxu0 0.0
    %969 = vmatprep.subr.mxu0 0.0
    %970 = vmatpush1.msra.mxu0 0.0
    %971 = vmatprep.subr.mxu0 0.0
    %972 = vmatpush1.msra.mxu0 0.0
    %973 = vmatprep.subr.mxu0 0.0
    %974 = vmatpush1.msra.mxu0 0.0
    %975 = vmatprep.subr.mxu0 0.0
    %976 = vmatpush1.msra.mxu0 0.0
    %977 = vmatprep.subr.mxu0 0.0
    %978 = vmatpush1.msra.mxu0 0.0
    %979 = vmatprep.subr.mxu0 0.0
    %980 = vmatpush1.msra.mxu0 0.0
    %981 = vmatprep.subr.mxu0 0.0
    %982 = vmatpush1.msra.mxu0 0.0
    %983 = vmatprep.subr.mxu0 0.0
    %984 = vmatpush1.msra.mxu0 0.0
    %985 = vmatprep.subr.mxu0 0.0
    %986 = vmatpush1.msra.mxu0 0.0
    %987 = vmatprep.subr.mxu0 0.0
    %988 = vmatpush1.msra.mxu0 0.0
    %989 = vmatprep.subr.mxu0 0.0
    %990 = vmatpush1.msra.mxu0 0.0
    %991 = vmatprep.subr.mxu0 0.0
    %992 = vmatpush1.msra.mxu0 0.0
    %993 = vmatprep.subr.mxu0 0.0
    %994 = vmatpush1.msra.mxu0 0.0
    %995 = vmatprep.subr.mxu0 0.0
    %996 = vmatpush1.msra.mxu0 0.0
    %997 = vmatprep.subr.mxu0 0.0
    %998 = vmatpush1.msra.mxu0 0.0
    %999 = vmatprep.subr.mxu0 0.0
    %1000 = vmatpush1.msra.mxu0 0.0
    %1001 = vmatprep.subr.mxu0 0.0
    %1002 = vmatpush1.msra.mxu0 0.0
    %1003 = vmatprep.subr.mxu0 0.0
    %1004 = vmatpush1.msra.mxu0 0.0
    %1005 = vmatprep.subr.mxu0 0.0
    %1006 = vmatpush1.msra.mxu0 0.0
    %1007 = vmatprep.subr.mxu0 0.0
    %1008 = vmatpush1.msra.mxu0 0.0
    %1009 = vmatprep.subr.mxu0 0.0
    %1010 = vmatpush1.msra.mxu0 0.0
    %1011 = vmatprep.subr.mxu0 0.0
    %1012 = vmatpush1.msra.mxu0 0.0
    %1013 = vmatprep.subr.mxu0 0.0
    %1014 = vmatpush1.msra.mxu0 0.0
    %1015 = vmatprep.mubr.f32.mxu0 0.0
    %1016 = vmatmul.mubr.f32.gmra.mrb[0].mxu0 %v949
    %v1017 = vpop.f32.mrb[0].mxu0
    %v1018 = vadd.f32 0.0, %v1017
    %v1019 = vpop.f32.mrb[0].mxu0
    %1020 = vdwg.mxu0
    %v1021 = vadd.f32 %v247, %v1018
    %v1022 = vtanh.pop %v1021
    %v1023 = vmul.f32 %v1022, %v89
    %v1024 = vadd.f32 %v1023, %v90
    %v1025 = vmul.f32 %v1024, %v937
    %1027 = vrot.lane.b32.xlu0 %v1024, 64
    %v1028 = vpop.permute.xlu0 %1027
    %v1030 = vmul.f32 %v1024, %v1028
    %1032 = vrot.lane.b32.xlu0 %v1030, 32
    %v1033 = vpop.permute.xlu0 %1032
    %v1035 = vadd.f32 %v1025, %v1033
    %v1036 = vtanh.pop %v1035
    %1038 = vrot.lane.b32.xlu0 %v1036, 64
    %v1039 = vpop.permute.xlu0 %1038
    %v1041 = vmul.f32 %v1024, %v1039
    %1043 = vrot.lane.b32.xlu0 %v1041, 32
    %v1044 = vpop.permute.xlu0 %1043
    %1046 = vst.msk [vmem:[#allocation2 + $0x38] sm:$0xff] %vm110, %v1044
    %1047 = vst.msk [vmem:[#allocation10] sm:$0xff] %vm110, %v1044
    %1049 = vrot.lane.b32.xlu0 %v1035, 96
    %v1050 = vpop.permute.xlu0 %1049
    %1052 = vst.msk [vmem:[#allocation12] sm:$0xff] %vm110, %v1050
    %v1053 = vld [vmem:[#allocation2] sm:$0xff]
    %v1054 = vld [vmem:[#allocation2 + $0x8] sm:$0xff]
    %v1055 = vld [vmem:[#allocation2 + $0x10] sm:$0xff]
    %v1056 = vld [vmem:[#allocation2 + $0x18] sm:$0xff]
    %v1057 = vld [vmem:[#allocation2 + $0x20] sm:$0xff]
    %v1058 = vld [vmem:[#allocation2 + $0x28] sm:$0xff]
    %v1059 = vld [vmem:[#allocation2 + $0x30] sm:$0xff]
    %v1060 = vld [vmem:[#allocation2 + $0x38] sm:$0xff]
    %v1061 = vld [vmem:[%s6] sm:$0xff]
    %v1062 = vld [vmem:[%s6 + $0x8] sm:$0xff]
    %v1063 = vld [vmem:[%s6 + $0x10] sm:$0xff]
    %v1064 = vld [vmem:[%s6 + $0x18] sm:$0xff]
    %v1065 = vld [vmem:[%s8] sm:$0x1]
    %v1067 = vlaneseq
    %v1068 = vshrl.u32 %v1067, 7
    %v1069 = vsub.s32 0, %v1068
    %v1070 = vrot.slane %v1065, %v1069
    %v1073 = vsel %vm110, %v1053, 0
    %v1076 = vsel %vm110, %v1054, 0
    %v1079 = vsel %vm110, %v1055, 0
    %v1082 = vsel %vm110, %v1056, 0
    %v1085 = vsel %vm110, %v1057, 0
    %v1088 = vsel %vm110, %v1058, 0
    %v1091 = vsel %vm110, %v1059, 0
    %v1094 = vsel %vm110, %v1060, 0
    %1096 = vmatprep.subr.mxu0 0.0
    %1097 = vmatpush1.msra.mxu0 %v1061
    %1098 = vmatprep.subr.mxu0 0.0
    %1099 = vmatpush1.msra.mxu0 %v1062
    %1100 = vmatprep.subr.mxu0 0.0
    %1101 = vmatpush1.msra.mxu0 %v1063
    %1102 = vmatprep.subr.mxu0 0.0
    %1103 = vmatpush1.msra.mxu0 %v1064
    %1104 = vmatprep.subr.mxu0 0.0
    %1105 = vmatpush1.msra.mxu0 0.0
    %1106 = vmatprep.subr.mxu0 0.0
    %1107 = vmatpush1.msra.mxu0 0.0
    %1108 = vmatprep.subr.mxu0 0.0
    %1109 = vmatpush1.msra.mxu0 0.0
    %1110 = vmatprep.subr.mxu0 0.0
    %1111 = vmatpush1.msra.mxu0 0.0
    %1112 = vmatprep.subr.mxu0 0.0
    %1113 = vmatpush1.msra.mxu0 0.0
    %1114 = vmatprep.subr.mxu0 0.0
    %1115 = vmatpush1.msra.mxu0 0.0
    %1116 = vmatprep.subr.mxu0 0.0
    %1117 = vmatpush1.msra.mxu0 0.0
    %1118 = vmatprep.subr.mxu0 0.0
    %1119 = vmatpush1.msra.mxu0 0.0
    %1120 = vmatprep.subr.mxu0 0.0
    %1121 = vmatpush1.msra.mxu0 0.0
    %1122 = vmatprep.subr.mxu0 0.0
    %1123 = vmatpush1.msra.mxu0 0.0
    %1124 = vmatprep.subr.mxu0 0.0
    %1125 = vmatpush1.msra.mxu0 0.0
    %1126 = vmatprep.subr.mxu0 0.0
    %1127 = vmatpush1.msra.mxu0 0.0
    %1128 = vmatprep.subr.mxu0 0.0
    %1129 = vmatpush1.msra.mxu0 0.0
    %1130 = vmatprep.subr.mxu0 0.0
    %1131 = vmatpush1.msra.mxu0 0.0
    %1132 = vmatprep.subr.mxu0 0.0
    %1133 = vmatpush1.msra.mxu0 0.0
    %1134 = vmatprep.subr.mxu0 0.0
    %1135 = vmatpush1.msra.mxu0 0.0
    %1136 = vmatprep.subr.mxu0 0.0
    %1137 = vmatpush1.msra.mxu0 0.0
    %1138 = vmatprep.subr.mxu0 0.0
    %1139 = vmatpush1.msra.mxu0 0.0
    %1140 = vmatprep.subr.mxu0 0.0
    %1141 = vmatpush1.msra.mxu0 0.0
    %1142 = vmatprep.subr.mxu0 0.0
    %1143 = vmatpush1.msra.mxu0 0.0
    %1144 = vmatprep.subr.mxu0 0.0
    %1145 = vmatpush1.msra.mxu0 0.0
    %1146 = vmatprep.subr.mxu0 0.0
    %1147 = vmatpush1.msra.mxu0 0.0
    %1148 = vmatprep.subr.mxu0 0.0
    %1149 = vmatpush1.msra.mxu0 0.0
    %1150 = vmatprep.subr.mxu0 0.0
    %1151 = vmatpush1.msra.mxu0 0.0
    %1152 = vmatprep.subr.mxu0 0.0
    %1153 = vmatpush1.msra.mxu0 0.0
    %1154 = vmatprep.subr.mxu0 0.0
    %1155 = vmatpush1.msra.mxu0 0.0
    %1156 = vmatprep.subr.mxu0 0.0
    %1157 = vmatpush1.msra.mxu0 0.0
    %1158 = vmatprep.subr.mxu0 0.0
    %1159 = vmatpush1.msra.mxu0 0.0
    %1160 = vmatprep.mubr.f32.mxu0 0.0
    %1161 = vmatmul.mubr.f32.gmra.mrb[0].mxu0 %v1073
    %v1162 = vpop.f32.mrb[0].mxu0
    %v1163 = vadd.f32 %v1070, %v1162
    %v1164 = vpop.f32.mrb[0].mxu0
    %1165 = vmatprep.mubr.f32.mxu0 0.0
    %1166 = vmatmul.mubr.f32.gmra.mrb[0].mxu0 %v1076
    %v1167 = vpop.f32.mrb[0].mxu0
    %v1168 = vadd.f32 %v1070, %v1167
    %v1169 = vpop.f32.mrb[0].mxu0
    %1170 = vmatprep.mubr.f32.mxu0 0.0
    %1171 = vmatmul.mubr.f32.gmra.mrb[0].mxu0 %v1079
    %v1172 = vpop.f32.mrb[0].mxu0
    %v1173 = vadd.f32 %v1070, %v1172
    %v1174 = vpop.f32.mrb[0].mxu0
    %1175 = vmatprep.mubr.f32.mxu0 0.0
    %1176 = vmatmul.mubr.f32.gmra.mrb[0].mxu0 %v1082
    %v1177 = vpop.f32.mrb[0].mxu0
    %v1178 = vadd.f32 %v1070, %v1177
    %v1179 = vpop.f32.mrb[0].mxu0
    %1180 = vmatprep.mubr.f32.mxu0 0.0
    %1181 = vmatmul.mubr.f32.gmra.mrb[0].mxu0 %v1085
    %v1182 = vpop.f32.mrb[0].mxu0
    %v1183 = vadd.f32 %v1070, %v1182
    %v1184 = vpop.f32.mrb[0].mxu0
    %1185 = vmatprep.mubr.f32.mxu0 0.0
    %1186 = vmatmul.mubr.f32.gmra.mrb[0].mxu0 %v1088
    %v1187 = vpop.f32.mrb[0].mxu0
    %v1188 = vadd.f32 %v1070, %v1187
    %v1189 = vpop.f32.mrb[0].mxu0
    %1190 = vmatprep.mubr.f32.mxu0 0.0
    %1191 = vmatmul.mubr.f32.gmra.mrb[0].mxu0 %v1091
    %v1192 = vpop.f32.mrb[0].mxu0
    %v1193 = vadd.f32 %v1070, %v1192
    %v1194 = vpop.f32.mrb[0].mxu0
    %1195 = vmatprep.mubr.f32.mxu0 0.0
    %1196 = vmatmul.mubr.f32.gmra.mrb[0].mxu0 %v1094
    %v1197 = vpop.f32.mrb[0].mxu0
    %v1198 = vadd.f32 %v1070, %v1197
    %v1199 = vpop.f32.mrb[0].mxu0
    %1200 = vdwg.mxu0
    %v1201 = vmul.f32 %v1163, %v89
    %v1202 = vmul.f32 %v1168, %v89
    %v1203 = vmul.f32 %v1173, %v89
    %v1204 = vmul.f32 %v1178, %v89
    %v1205 = vmul.f32 %v1183, %v89
    %v1206 = vmul.f32 %v1188, %v89
    %v1207 = vmul.f32 %v1193, %v89
    %v1208 = vmul.f32 %v1198, %v89
    %v1209 = vld [vmem:[%s7] sm:$0xff]
    %v1210 = vld [vmem:[%s7 + $0x8] sm:$0xff]
    %v1211 = vld [vmem:[%s7 + $0x10] sm:$0xff]
    %v1212 = vld [vmem:[%s7 + $0x18] sm:$0xff]
    %v1213 = vmul.f32 %v1209, %v89
    %v1214 = vmul.f32 %v1210, %v89
    %v1215 = vmul.f32 %v1211, %v89
    %v1216 = vmul.f32 %v1212, %v89
    %s1217 = scalar_lea.vmem [#allocation3], 8
    %v1218 = vld [vmem:[%s1217] sm:$0xff]
    %s1219 = scalar_lea.vmem [#allocation6], 8
    %v1220 = vld [vmem:[%s1219] sm:$0xff]
    %v1222 = vsel %vm110, %v1218, 0
    %1224 = vmatprep.subr.mxu0 0.0
    %1225 = vmatpush1.msra.mxu0 %v1213
    %1226 = vmatprep.subr.mxu0 0.0
    %1227 = vmatpush1.msra.mxu0 %v1214
    %1228 = vmatprep.subr.mxu0 0.0
    %1229 = vmatpush1.msra.mxu0 %v1215
    %1230 = vmatprep.subr.mxu0 0.0
    %1231 = vmatpush1.msra.mxu0 %v1216
    %1232 = vmatprep.subr.mxu0 0.0
    %1233 = vmatpush1.msra.mxu0 0.0
    %1234 = vmatprep.subr.mxu0 0.0
    %1235 = vmatpush1.msra.mxu0 0.0
    %1236 = vmatprep.subr.mxu0 0.0
    %1237 = vmatpush1.msra.mxu0 0.0
    %1238 = vmatprep.subr.mxu0 0.0
    %1239 = vmatpush1.msra.mxu0 0.0
    %1240 = vmatprep.subr.mxu0 0.0
    %1241 = vmatpush1.msra.mxu0 0.0
    %1242 = vmatprep.subr.mxu0 0.0
    %1243 = vmatpush1.msra.mxu0 0.0
    %1244 = vmatprep.subr.mxu0 0.0
    %1245 = vmatpush1.msra.mxu0 0.0
    %1246 = vmatprep.subr.mxu0 0.0
    %1247 = vmatpush1.msra.mxu0 0.0
    %1248 = vmatprep.subr.mxu0 0.0
    %1249 = vmatpush1.msra.mxu0 0.0
    %1250 = vmatprep.subr.mxu0 0.0
    %1251 = vmatpush1.msra.mxu0 0.0
    %1252 = vmatprep.subr.mxu0 0.0
    %1253 = vmatpush1.msra.mxu0 0.0
    %1254 = vmatprep.subr.mxu0 0.0
    %1255 = vmatpush1.msra.mxu0 0.0
    %1256 = vmatprep.subr.mxu0 0.0
    %1257 = vmatpush1.msra.mxu0 0.0
    %1258 = vmatprep.subr.mxu0 0.0
    %1259 = vmatpush1.msra.mxu0 0.0
    %1260 = vmatprep.subr.mxu0 0.0
    %1261 = vmatpush1.msra.mxu0 0.0
    %1262 = vmatprep.subr.mxu0 0.0
    %1263 = vmatpush1.msra.mxu0 0.0
    %1264 = vmatprep.subr.mxu0 0.0
    %1265 = vmatpush1.msra.mxu0 0.0
    %1266 = vmatprep.subr.mxu0 0.0
    %1267 = vmatpush1.msra.mxu0 0.0
    %1268 = vmatprep.subr.mxu0 0.0
    %1269 = vmatpush1.msra.mxu0 0.0
    %1270 = vmatprep.subr.mxu0 0.0
    %1271 = vmatpush1.msra.mxu0 0.0
    %1272 = vmatprep.subr.mxu0 0.0
    %1273 = vmatpush1.msra.mxu0 0.0
    %1274 = vmatprep.subr.mxu0 0.0
    %1275 = vmatpush1.msra.mxu0 0.0
    %1276 = vmatprep.subr.mxu0 0.0
    %1277 = vmatpush1.msra.mxu0 0.0
    %1278 = vmatprep.subr.mxu0 0.0
    %1279 = vmatpush1.msra.mxu0 0.0
    %1280 = vmatprep.subr.mxu0 0.0
    %1281 = vmatpush1.msra.mxu0 0.0
    %1282 = vmatprep.subr.mxu0 0.0
    %1283 = vmatpush1.msra.mxu0 0.0
    %1284 = vmatprep.subr.mxu0 0.0
    %1285 = vmatpush1.msra.mxu0 0.0
    %1286 = vmatprep.subr.mxu0 0.0
    %1287 = vmatpush1.msra.mxu0 0.0
    %1288 = vmatprep.mubr.f32.mxu0 0.0
    %1289 = vmatmul.mubr.f32.gmra.mrb[0].mxu0 %v1222
    %v1290 = vpop.f32.mrb[0].mxu0
    %v1291 = vadd.f32 0.0, %v1290
    %v1292 = vpop.f32.mrb[0].mxu0
    %1293 = vdwg.mxu0
    %v1294 = vadd.f32 %v1201, %v1291
    %v1295 = vtanh.pop %v1294
    %v1296 = vmul.f32 %v1295, %v89
    %v1297 = vadd.f32 %v1296, %v90
    %1299 = vrot.lane.b32.xlu0 %v1220, 32
    %v1300 = vpop.permute.xlu0 %1299
    %v1302 = vmul.f32 %v1297, %v1300
    %1304 = vrot.lane.b32.xlu0 %v1297, 64
    %v1305 = vpop.permute.xlu0 %1304
    %v1307 = vmul.f32 %v1297, %v1305
    %1309 = vrot.lane.b32.xlu0 %v1307, 32
    %v1310 = vpop.permute.xlu0 %1309
    %v1312 = vadd.f32 %v1302, %v1310
    %v1313 = vtanh.pop %v1312
    %1315 = vrot.lane.b32.xlu0 %v1313, 64
    %v1316 = vpop.permute.xlu0 %1315
    %v1318 = vmul.f32 %v1297, %v1316
    %1320 = vrot.lane.b32.xlu0 %v1318, 32
    %v1321 = vpop.permute.xlu0 %1320
    %v1322 = vsel %vm110, %v1321, 0
    %1324 = vmatprep.subr.mxu0 0.0
    %1325 = vmatpush1.msra.mxu0 %v1213
    %1326 = vmatprep.subr.mxu0 0.0
    %1327 = vmatpush1.msra.mxu0 %v1214
    %1328 = vmatprep.subr.mxu0 0.0
    %1329 = vmatpush1.msra.mxu0 %v1215
    %1330 = vmatprep.subr.mxu0 0.0
    %1331 = vmatpush1.msra.mxu0 %v1216
    %1332 = vmatprep.subr.mxu0 0.0
    %1333 = vmatpush1.msra.mxu0 0.0
    %1334 = vmatprep.subr.mxu0 0.0
    %1335 = vmatpush1.msra.mxu0 0.0
    %1336 = vmatprep.subr.mxu0 0.0
    %1337 = vmatpush1.msra.mxu0 0.0
    %1338 = vmatprep.subr.mxu0 0.0
    %1339 = vmatpush1.msra.mxu0 0.0
    %1340 = vmatprep.subr.mxu0 0.0
    %1341 = vmatpush1.msra.mxu0 0.0
    %1342 = vmatprep.subr.mxu0 0.0
    %1343 = vmatpush1.msra.mxu0 0.0
    %1344 = vmatprep.subr.mxu0 0.0
    %1345 = vmatpush1.msra.mxu0 0.0
    %1346 = vmatprep.subr.mxu0 0.0
    %1347 = vmatpush1.msra.mxu0 0.0
    %1348 = vmatprep.subr.mxu0 0.0
    %1349 = vmatpush1.msra.mxu0 0.0
    %1350 = vmatprep.subr.mxu0 0.0
    %1351 = vmatpush1.msra.mxu0 0.0
    %1352 = vmatprep.subr.mxu0 0.0
    %1353 = vmatpush1.msra.mxu0 0.0
    %1354 = vmatprep.subr.mxu0 0.0
    %1355 = vmatpush1.msra.mxu0 0.0
    %1356 = vmatprep.subr.mxu0 0.0
    %1357 = vmatpush1.msra.mxu0 0.0
    %1358 = vmatprep.subr.mxu0 0.0
    %1359 = vmatpush1.msra.mxu0 0.0
    %1360 = vmatprep.subr.mxu0 0.0
    %1361 = vmatpush1.msra.mxu0 0.0
    %1362 = vmatprep.subr.mxu0 0.0
    %1363 = vmatpush1.msra.mxu0 0.0
    %1364 = vmatprep.subr.mxu0 0.0
    %1365 = vmatpush1.msra.mxu0 0.0
    %1366 = vmatprep.subr.mxu0 0.0
    %1367 = vmatpush1.msra.mxu0 0.0
    %1368 = vmatprep.subr.mxu0 0.0
    %1369 = vmatpush1.msra.mxu0 0.0
    %1370 = vmatprep.subr.mxu0 0.0
    %1371 = vmatpush1.msra.mxu0 0.0
    %1372 = vmatprep.subr.mxu0 0.0
    %1373 = vmatpush1.msra.mxu0 0.0
    %1374 = vmatprep.subr.mxu0 0.0
    %1375 = vmatpush1.msra.mxu0 0.0
    %1376 = vmatprep.subr.mxu0 0.0
    %1377 = vmatpush1.msra.mxu0 0.0
    %1378 = vmatprep.subr.mxu0 0.0
    %1379 = vmatpush1.msra.mxu0 0.0
    %1380 = vmatprep.subr.mxu0 0.0
    %1381 = vmatpush1.msra.mxu0 0.0
    %1382 = vmatprep.subr.mxu0 0.0
    %1383 = vmatpush1.msra.mxu0 0.0
    %1384 = vmatprep.subr.mxu0 0.0
    %1385 = vmatpush1.msra.mxu0 0.0
    %1386 = vmatprep.subr.mxu0 0.0
    %1387 = vmatpush1.msra.mxu0 0.0
    %1388 = vmatprep.mubr.f32.mxu0 0.0
    %1389 = vmatmul.mubr.f32.gmra.mrb[0].mxu0 %v1322
    %v1390 = vpop.f32.mrb[0].mxu0
    %v1391 = vadd.f32 0.0, %v1390
    %v1392 = vpop.f32.mrb[0].mxu0
    %1393 = vdwg.mxu0
    %v1394 = vadd.f32 %v1202, %v1391
    %v1395 = vtanh.pop %v1394
    %v1396 = vmul.f32 %v1395, %v89
    %v1397 = vadd.f32 %v1396, %v90
    %v1398 = vmul.f32 %v1397, %v1312
    %1400 = vrot.lane.b32.xlu0 %v1397, 64
    %v1401 = vpop.permute.xlu0 %1400
    %v1403 = vmul.f32 %v1397, %v1401
    %1405 = vrot.lane.b32.xlu0 %v1403, 32
    %v1406 = vpop.permute.xlu0 %1405
    %v1408 = vadd.f32 %v1398, %v1406
    %v1409 = vtanh.pop %v1408
    %1411 = vrot.lane.b32.xlu0 %v1409, 64
    %v1412 = vpop.permute.xlu0 %1411
    %v1414 = vmul.f32 %v1397, %v1412
    %1416 = vrot.lane.b32.xlu0 %v1414, 32
    %v1417 = vpop.permute.xlu0 %1416
    %v1418 = vsel %vm110, %v1417, 0
    %1420 = vmatprep.subr.mxu0 0.0
    %1421 = vmatpush1.msra.mxu0 %v1213
    %1422 = vmatprep.subr.mxu0 0.0
    %1423 = vmatpush1.msra.mxu0 %v1214
    %1424 = vmatprep.subr.mxu0 0.0
    %1425 = vmatpush1.msra.mxu0 %v1215
    %1426 = vmatprep.subr.mxu0 0.0
    %1427 = vmatpush1.msra.mxu0 %v1216
    %1428 = vmatprep.subr.mxu0 0.0
    %1429 = vmatpush1.msra.mxu0 0.0
    %1430 = vmatprep.subr.mxu0 0.0
    %1431 = vmatpush1.msra.mxu0 0.0
    %1432 = vmatprep.subr.mxu0 0.0
    %1433 = vmatpush1.msra.mxu0 0.0
    %1434 = vmatprep.subr.mxu0 0.0
    %1435 = vmatpush1.msra.mxu0 0.0
    %1436 = vmatprep.subr.mxu0 0.0
    %1437 = vmatpush1.msra.mxu0 0.0
    %1438 = vmatprep.subr.mxu0 0.0
    %1439 = vmatpush1.msra.mxu0 0.0
    %1440 = vmatprep.subr.mxu0 0.0
    %1441 = vmatpush1.msra.mxu0 0.0
    %1442 = vmatprep.subr.mxu0 0.0
    %1443 = vmatpush1.msra.mxu0 0.0
    %1444 = vmatprep.subr.mxu0 0.0
    %1445 = vmatpush1.msra.mxu0 0.0
    %1446 = vmatprep.subr.mxu0 0.0
    %1447 = vmatpush1.msra.mxu0 0.0
    %1448 = vmatprep.subr.mxu0 0.0
    %1449 = vmatpush1.msra.mxu0 0.0
    %1450 = vmatprep.subr.mxu0 0.0
    %1451 = vmatpush1.msra.mxu0 0.0
    %1452 = vmatprep.subr.mxu0 0.0
    %1453 = vmatpush1.msra.mxu0 0.0
    %1454 = vmatprep.subr.mxu0 0.0
    %1455 = vmatpush1.msra.mxu0 0.0
    %1456 = vmatprep.subr.mxu0 0.0
    %1457 = vmatpush1.msra.mxu0 0.0
    %1458 = vmatprep.subr.mxu0 0.0
    %1459 = vmatpush1.msra.mxu0 0.0
    %1460 = vmatprep.subr.mxu0 0.0
    %1461 = vmatpush1.msra.mxu0 0.0
    %1462 = vmatprep.subr.mxu0 0.0
    %1463 = vmatpush1.msra.mxu0 0.0
    %1464 = vmatprep.subr.mxu0 0.0
    %1465 = vmatpush1.msra.mxu0 0.0
    %1466 = vmatprep.subr.mxu0 0.0
    %1467 = vmatpush1.msra.mxu0 0.0
    %1468 = vmatprep.subr.mxu0 0.0
    %1469 = vmatpush1.msra.mxu0 0.0
    %1470 = vmatprep.subr.mxu0 0.0
    %1471 = vmatpush1.msra.mxu0 0.0
    %1472 = vmatprep.subr.mxu0 0.0
    %1473 = vmatpush1.msra.mxu0 0.0
    %1474 = vmatprep.subr.mxu0 0.0
    %1475 = vmatpush1.msra.mxu0 0.0
    %1476 = vmatprep.subr.mxu0 0.0
    %1477 = vmatpush1.msra.mxu0 0.0
    %1478 = vmatprep.subr.mxu0 0.0
    %1479 = vmatpush1.msra.mxu0 0.0
    %1480 = vmatprep.subr.mxu0 0.0
    %1481 = vmatpush1.msra.mxu0 0.0
    %1482 = vmatprep.subr.mxu0 0.0
    %1483 = vmatpush1.msra.mxu0 0.0
    %1484 = vmatprep.mubr.f32.mxu0 0.0
    %1485 = vmatmul.mubr.f32.gmra.mrb[0].mxu0 %v1418
    %v1486 = vpop.f32.mrb[0].mxu0
    %v1487 = vadd.f32 0.0, %v1486
    %v1488 = vpop.f32.mrb[0].mxu0
    %1489 = vdwg.mxu0
    %v1490 = vadd.f32 %v1203, %v1487
    %v1491 = vtanh.pop %v1490
    %v1492 = vmul.f32 %v1491, %v89
    %v1493 = vadd.f32 %v1492, %v90
    %v1494 = vmul.f32 %v1493, %v1408
    %1496 = vrot.lane.b32.xlu0 %v1493, 64
    %v1497 = vpop.permute.xlu0 %1496
    %v1499 = vmul.f32 %v1493, %v1497
    %1501 = vrot.lane.b32.xlu0 %v1499, 32
    %v1502 = vpop.permute.xlu0 %1501
    %v1504 = vadd.f32 %v1494, %v1502
    %v1505 = vtanh.pop %v1504
    %1507 = vrot.lane.b32.xlu0 %v1505, 64
    %v1508 = vpop.permute.xlu0 %1507
    %v1510 = vmul.f32 %v1493, %v1508
    %1512 = vrot.lane.b32.xlu0 %v1510, 32
    %v1513 = vpop.permute.xlu0 %1512
    %v1514 = vsel %vm110, %v1513, 0
    %1516 = vmatprep.subr.mxu0 0.0
    %1517 = vmatpush1.msra.mxu0 %v1213
    %1518 = vmatprep.subr.mxu0 0.0
    %1519 = vmatpush1.msra.mxu0 %v1214
    %1520 = vmatprep.subr.mxu0 0.0
    %1521 = vmatpush1.msra.mxu0 %v1215
    %1522 = vmatprep.subr.mxu0 0.0
    %1523 = vmatpush1.msra.mxu0 %v1216
    %1524 = vmatprep.subr.mxu0 0.0
    %1525 = vmatpush1.msra.mxu0 0.0
    %1526 = vmatprep.subr.mxu0 0.0
    %1527 = vmatpush1.msra.mxu0 0.0
    %1528 = vmatprep.subr.mxu0 0.0
    %1529 = vmatpush1.msra.mxu0 0.0
    %1530 = vmatprep.subr.mxu0 0.0
    %1531 = vmatpush1.msra.mxu0 0.0
    %1532 = vmatprep.subr.mxu0 0.0
    %1533 = vmatpush1.msra.mxu0 0.0
    %1534 = vmatprep.subr.mxu0 0.0
    %1535 = vmatpush1.msra.mxu0 0.0
    %1536 = vmatprep.subr.mxu0 0.0
    %1537 = vmatpush1.msra.mxu0 0.0
    %1538 = vmatprep.subr.mxu0 0.0
    %1539 = vmatpush1.msra.mxu0 0.0
    %1540 = vmatprep.subr.mxu0 0.0
    %1541 = vmatpush1.msra.mxu0 0.0
    %1542 = vmatprep.subr.mxu0 0.0
    %1543 = vmatpush1.msra.mxu0 0.0
    %1544 = vmatprep.subr.mxu0 0.0
    %1545 = vmatpush1.msra.mxu0 0.0
    %1546 = vmatprep.subr.mxu0 0.0
    %1547 = vmatpush1.msra.mxu0 0.0
    %1548 = vmatprep.subr.mxu0 0.0
    %1549 = vmatpush1.msra.mxu0 0.0
    %1550 = vmatprep.subr.mxu0 0.0
    %1551 = vmatpush1.msra.mxu0 0.0
    %1552 = vmatprep.subr.mxu0 0.0
    %1553 = vmatpush1.msra.mxu0 0.0
    %1554 = vmatprep.subr.mxu0 0.0
    %1555 = vmatpush1.msra.mxu0 0.0
    %1556 = vmatprep.subr.mxu0 0.0
    %1557 = vmatpush1.msra.mxu0 0.0
    %1558 = vmatprep.subr.mxu0 0.0
    %1559 = vmatpush1.msra.mxu0 0.0
    %1560 = vmatprep.subr.mxu0 0.0
    %1561 = vmatpush1.msra.mxu0 0.0
    %1562 = vmatprep.subr.mxu0 0.0
    %1563 = vmatpush1.msra.mxu0 0.0
    %1564 = vmatprep.subr.mxu0 0.0
    %1565 = vmatpush1.msra.mxu0 0.0
    %1566 = vmatprep.subr.mxu0 0.0
    %1567 = vmatpush1.msra.mxu0 0.0
    %1568 = vmatprep.subr.mxu0 0.0
    %1569 = vmatpush1.msra.mxu0 0.0
    %1570 = vmatprep.subr.mxu0 0.0
    %1571 = vmatpush1.msra.mxu0 0.0
    %1572 = vmatprep.subr.mxu0 0.0
    %1573 = vmatpush1.msra.mxu0 0.0
    %1574 = vmatprep.subr.mxu0 0.0
    %1575 = vmatpush1.msra.mxu0 0.0
    %1576 = vmatprep.subr.mxu0 0.0
    %1577 = vmatpush1.msra.mxu0 0.0
    %1578 = vmatprep.subr.mxu0 0.0
    %1579 = vmatpush1.msra.mxu0 0.0
    %1580 = vmatprep.mubr.f32.mxu0 0.0
    %1581 = vmatmul.mubr.f32.gmra.mrb[0].mxu0 %v1514
    %v1582 = vpop.f32.mrb[0].mxu0
    %v1583 = vadd.f32 0.0, %v1582
    %v1584 = vpop.f32.mrb[0].mxu0
    %1585 = vdwg.mxu0
    %v1586 = vadd.f32 %v1204, %v1583
    %v1587 = vtanh.pop %v1586
    %v1588 = vmul.f32 %v1587, %v89
    %v1589 = vadd.f32 %v1588, %v90
    %v1590 = vmul.f32 %v1589, %v1504
    %1592 = vrot.lane.b32.xlu0 %v1589, 64
    %v1593 = vpop.permute.xlu0 %1592
    %v1595 = vmul.f32 %v1589, %v1593
    %1597 = vrot.lane.b32.xlu0 %v1595, 32
    %v1598 = vpop.permute.xlu0 %1597
    %v1600 = vadd.f32 %v1590, %v1598
    %v1601 = vtanh.pop %v1600
    %1603 = vrot.lane.b32.xlu0 %v1601, 64
    %v1604 = vpop.permute.xlu0 %1603
    %v1606 = vmul.f32 %v1589, %v1604
    %1608 = vrot.lane.b32.xlu0 %v1606, 32
    %v1609 = vpop.permute.xlu0 %1608
    %v1610 = vsel %vm110, %v1609, 0
    %1612 = vmatprep.subr.mxu0 0.0
    %1613 = vmatpush1.msra.mxu0 %v1213
    %1614 = vmatprep.subr.mxu0 0.0
    %1615 = vmatpush1.msra.mxu0 %v1214
    %1616 = vmatprep.subr.mxu0 0.0
    %1617 = vmatpush1.msra.mxu0 %v1215
    %1618 = vmatprep.subr.mxu0 0.0
    %1619 = vmatpush1.msra.mxu0 %v1216
    %1620 = vmatprep.subr.mxu0 0.0
    %1621 = vmatpush1.msra.mxu0 0.0
    %1622 = vmatprep.subr.mxu0 0.0
    %1623 = vmatpush1.msra.mxu0 0.0
    %1624 = vmatprep.subr.mxu0 0.0
    %1625 = vmatpush1.msra.mxu0 0.0
    %1626 = vmatprep.subr.mxu0 0.0
    %1627 = vmatpush1.msra.mxu0 0.0
    %1628 = vmatprep.subr.mxu0 0.0
    %1629 = vmatpush1.msra.mxu0 0.0
    %1630 = vmatprep.subr.mxu0 0.0
    %1631 = vmatpush1.msra.mxu0 0.0
    %1632 = vmatprep.subr.mxu0 0.0
    %1633 = vmatpush1.msra.mxu0 0.0
    %1634 = vmatprep.subr.mxu0 0.0
    %1635 = vmatpush1.msra.mxu0 0.0
    %1636 = vmatprep.subr.mxu0 0.0
    %1637 = vmatpush1.msra.mxu0 0.0
    %1638 = vmatprep.subr.mxu0 0.0
    %1639 = vmatpush1.msra.mxu0 0.0
    %1640 = vmatprep.subr.mxu0 0.0
    %1641 = vmatpush1.msra.mxu0 0.0
    %1642 = vmatprep.subr.mxu0 0.0
    %1643 = vmatpush1.msra.mxu0 0.0
    %1644 = vmatprep.subr.mxu0 0.0
    %1645 = vmatpush1.msra.mxu0 0.0
    %1646 = vmatprep.subr.mxu0 0.0
    %1647 = vmatpush1.msra.mxu0 0.0
    %1648 = vmatprep.subr.mxu0 0.0
    %1649 = vmatpush1.msra.mxu0 0.0
    %1650 = vmatprep.subr.mxu0 0.0
    %1651 = vmatpush1.msra.mxu0 0.0
    %1652 = vmatprep.subr.mxu0 0.0
    %1653 = vmatpush1.msra.mxu0 0.0
    %1654 = vmatprep.subr.mxu0 0.0
    %1655 = vmatpush1.msra.mxu0 0.0
    %1656 = vmatprep.subr.mxu0 0.0
    %1657 = vmatpush1.msra.mxu0 0.0
    %1658 = vmatprep.subr.mxu0 0.0
    %1659 = vmatpush1.msra.mxu0 0.0
    %1660 = vmatprep.subr.mxu0 0.0
    %1661 = vmatpush1.msra.mxu0 0.0
    %1662 = vmatprep.subr.mxu0 0.0
    %1663 = vmatpush1.msra.mxu0 0.0
    %1664 = vmatprep.subr.mxu0 0.0
    %1665 = vmatpush1.msra.mxu0 0.0
    %1666 = vmatprep.subr.mxu0 0.0
    %1667 = vmatpush1.msra.mxu0 0.0
    %1668 = vmatprep.subr.mxu0 0.0
    %1669 = vmatpush1.msra.mxu0 0.0
    %1670 = vmatprep.subr.mxu0 0.0
    %1671 = vmatpush1.msra.mxu0 0.0
    %1672 = vmatprep.subr.mxu0 0.0
    %1673 = vmatpush1.msra.mxu0 0.0
    %1674 = vmatprep.subr.mxu0 0.0
    %1675 = vmatpush1.msra.mxu0 0.0
    %1676 = vmatprep.mubr.f32.mxu0 0.0
    %1677 = vmatmul.mubr.f32.gmra.mrb[0].mxu0 %v1610
    %v1678 = vpop.f32.mrb[0].mxu0
    %v1679 = vadd.f32 0.0, %v1678
    %v1680 = vpop.f32.mrb[0].mxu0
    %1681 = vdwg.mxu0
    %v1682 = vadd.f32 %v1205, %v1679
    %v1683 = vtanh.pop %v1682
    %v1684 = vmul.f32 %v1683, %v89
    %v1685 = vadd.f32 %v1684, %v90
    %v1686 = vmul.f32 %v1685, %v1600
    %1688 = vrot.lane.b32.xlu0 %v1685, 64
    %v1689 = vpop.permute.xlu0 %1688
    %v1691 = vmul.f32 %v1685, %v1689
    %1693 = vrot.lane.b32.xlu0 %v1691, 32
    %v1694 = vpop.permute.xlu0 %1693
    %v1696 = vadd.f32 %v1686, %v1694
    %v1697 = vtanh.pop %v1696
    %1699 = vrot.lane.b32.xlu0 %v1697, 64
    %v1700 = vpop.permute.xlu0 %1699
    %v1702 = vmul.f32 %v1685, %v1700
    %1704 = vrot.lane.b32.xlu0 %v1702, 32
    %v1705 = vpop.permute.xlu0 %1704
    %v1706 = vsel %vm110, %v1705, 0
    %1708 = vmatprep.subr.mxu0 0.0
    %1709 = vmatpush1.msra.mxu0 %v1213
    %1710 = vmatprep.subr.mxu0 0.0
    %1711 = vmatpush1.msra.mxu0 %v1214
    %1712 = vmatprep.subr.mxu0 0.0
    %1713 = vmatpush1.msra.mxu0 %v1215
    %1714 = vmatprep.subr.mxu0 0.0
    %1715 = vmatpush1.msra.mxu0 %v1216
    %1716 = vmatprep.subr.mxu0 0.0
    %1717 = vmatpush1.msra.mxu0 0.0
    %1718 = vmatprep.subr.mxu0 0.0
    %1719 = vmatpush1.msra.mxu0 0.0
    %1720 = vmatprep.subr.mxu0 0.0
    %1721 = vmatpush1.msra.mxu0 0.0
    %1722 = vmatprep.subr.mxu0 0.0
    %1723 = vmatpush1.msra.mxu0 0.0
    %1724 = vmatprep.subr.mxu0 0.0
    %1725 = vmatpush1.msra.mxu0 0.0
    %1726 = vmatprep.subr.mxu0 0.0
    %1727 = vmatpush1.msra.mxu0 0.0
    %1728 = vmatprep.subr.mxu0 0.0
    %1729 = vmatpush1.msra.mxu0 0.0
    %1730 = vmatprep.subr.mxu0 0.0
    %1731 = vmatpush1.msra.mxu0 0.0
    %1732 = vmatprep.subr.mxu0 0.0
    %1733 = vmatpush1.msra.mxu0 0.0
    %1734 = vmatprep.subr.mxu0 0.0
    %1735 = vmatpush1.msra.mxu0 0.0
    %1736 = vmatprep.subr.mxu0 0.0
    %1737 = vmatpush1.msra.mxu0 0.0
    %1738 = vmatprep.subr.mxu0 0.0
    %1739 = vmatpush1.msra.mxu0 0.0
    %1740 = vmatprep.subr.mxu0 0.0
    %1741 = vmatpush1.msra.mxu0 0.0
    %1742 = vmatprep.subr.mxu0 0.0
    %1743 = vmatpush1.msra.mxu0 0.0
    %1744 = vmatprep.subr.mxu0 0.0
    %1745 = vmatpush1.msra.mxu0 0.0
    %1746 = vmatprep.subr.mxu0 0.0
    %1747 = vmatpush1.msra.mxu0 0.0
    %1748 = vmatprep.subr.mxu0 0.0
    %1749 = vmatpush1.msra.mxu0 0.0
    %1750 = vmatprep.subr.mxu0 0.0
    %1751 = vmatpush1.msra.mxu0 0.0
    %1752 = vmatprep.subr.mxu0 0.0
    %1753 = vmatpush1.msra.mxu0 0.0
    %1754 = vmatprep.subr.mxu0 0.0
    %1755 = vmatpush1.msra.mxu0 0.0
    %1756 = vmatprep.subr.mxu0 0.0
    %1757 = vmatpush1.msra.mxu0 0.0
    %1758 = vmatprep.subr.mxu0 0.0
    %1759 = vmatpush1.msra.mxu0 0.0
    %1760 = vmatprep.subr.mxu0 0.0
    %1761 = vmatpush1.msra.mxu0 0.0
    %1762 = vmatprep.subr.mxu0 0.0
    %1763 = vmatpush1.msra.mxu0 0.0
    %1764 = vmatprep.subr.mxu0 0.0
    %1765 = vmatpush1.msra.mxu0 0.0
    %1766 = vmatprep.subr.mxu0 0.0
    %1767 = vmatpush1.msra.mxu0 0.0
    %1768 = vmatprep.subr.mxu0 0.0
    %1769 = vmatpush1.msra.mxu0 0.0
    %1770 = vmatprep.subr.mxu0 0.0
    %1771 = vmatpush1.msra.mxu0 0.0
    %1772 = vmatprep.mubr.f32.mxu0 0.0
    %1773 = vmatmul.mubr.f32.gmra.mrb[0].mxu0 %v1706
    %v1774 = vpop.f32.mrb[0].mxu0
    %v1775 = vadd.f32 0.0, %v1774
    %v1776 = vpop.f32.mrb[0].mxu0
    %1777 = vdwg.mxu0
    %v1778 = vadd.f32 %v1206, %v1775
    %v1779 = vtanh.pop %v1778
    %v1780 = vmul.f32 %v1779, %v89
    %v1781 = vadd.f32 %v1780, %v90
    %v1782 = vmul.f32 %v1781, %v1696
    %1784 = vrot.lane.b32.xlu0 %v1781, 64
    %v1785 = vpop.permute.xlu0 %1784
    %v1787 = vmul.f32 %v1781, %v1785
    %1789 = vrot.lane.b32.xlu0 %v1787, 32
    %v1790 = vpop.permute.xlu0 %1789
    %v1792 = vadd.f32 %v1782, %v1790
    %v1793 = vtanh.pop %v1792
    %1795 = vrot.lane.b32.xlu0 %v1793, 64
    %v1796 = vpop.permute.xlu0 %1795
    %v1798 = vmul.f32 %v1781, %v1796
    %1800 = vrot.lane.b32.xlu0 %v1798, 32
    %v1801 = vpop.permute.xlu0 %1800
    %v1802 = vsel %vm110, %v1801, 0
    %1804 = vmatprep.subr.mxu0 0.0
    %1805 = vmatpush1.msra.mxu0 %v1213
    %1806 = vmatprep.subr.mxu0 0.0
    %1807 = vmatpush1.msra.mxu0 %v1214
    %1808 = vmatprep.subr.mxu0 0.0
    %1809 = vmatpush1.msra.mxu0 %v1215
    %1810 = vmatprep.subr.mxu0 0.0
    %1811 = vmatpush1.msra.mxu0 %v1216
    %1812 = vmatprep.subr.mxu0 0.0
    %1813 = vmatpush1.msra.mxu0 0.0
    %1814 = vmatprep.subr.mxu0 0.0
    %1815 = vmatpush1.msra.mxu0 0.0
    %1816 = vmatprep.subr.mxu0 0.0
    %1817 = vmatpush1.msra.mxu0 0.0
    %1818 = vmatprep.subr.mxu0 0.0
    %1819 = vmatpush1.msra.mxu0 0.0
    %1820 = vmatprep.subr.mxu0 0.0
    %1821 = vmatpush1.msra.mxu0 0.0
    %1822 = vmatprep.subr.mxu0 0.0
    %1823 = vmatpush1.msra.mxu0 0.0
    %1824 = vmatprep.subr.mxu0 0.0
    %1825 = vmatpush1.msra.mxu0 0.0
    %1826 = vmatprep.subr.mxu0 0.0
    %1827 = vmatpush1.msra.mxu0 0.0
    %1828 = vmatprep.subr.mxu0 0.0
    %1829 = vmatpush1.msra.mxu0 0.0
    %1830 = vmatprep.subr.mxu0 0.0
    %1831 = vmatpush1.msra.mxu0 0.0
    %1832 = vmatprep.subr.mxu0 0.0
    %1833 = vmatpush1.msra.mxu0 0.0
    %1834 = vmatprep.subr.mxu0 0.0
    %1835 = vmatpush1.msra.mxu0 0.0
    %1836 = vmatprep.subr.mxu0 0.0
    %1837 = vmatpush1.msra.mxu0 0.0
    %1838 = vmatprep.subr.mxu0 0.0
    %1839 = vmatpush1.msra.mxu0 0.0
    %1840 = vmatprep.subr.mxu0 0.0
    %1841 = vmatpush1.msra.mxu0 0.0
    %1842 = vmatprep.subr.mxu0 0.0
    %1843 = vmatpush1.msra.mxu0 0.0
    %1844 = vmatprep.subr.mxu0 0.0
    %1845 = vmatpush1.msra.mxu0 0.0
    %1846 = vmatprep.subr.mxu0 0.0
    %1847 = vmatpush1.msra.mxu0 0.0
    %1848 = vmatprep.subr.mxu0 0.0
    %1849 = vmatpush1.msra.mxu0 0.0
    %1850 = vmatprep.subr.mxu0 0.0
    %1851 = vmatpush1.msra.mxu0 0.0
    %1852 = vmatprep.subr.mxu0 0.0
    %1853 = vmatpush1.msra.mxu0 0.0
    %1854 = vmatprep.subr.mxu0 0.0
    %1855 = vmatpush1.msra.mxu0 0.0
    %1856 = vmatprep.subr.mxu0 0.0
    %1857 = vmatpush1.msra.mxu0 0.0
    %1858 = vmatprep.subr.mxu0 0.0
    %1859 = vmatpush1.msra.mxu0 0.0
    %1860 = vmatprep.subr.mxu0 0.0
    %1861 = vmatpush1.msra.mxu0 0.0
    %1862 = vmatprep.subr.mxu0 0.0
    %1863 = vmatpush1.msra.mxu0 0.0
    %1864 = vmatprep.subr.mxu0 0.0
    %1865 = vmatpush1.msra.mxu0 0.0
    %1866 = vmatprep.subr.mxu0 0.0
    %1867 = vmatpush1.msra.mxu0 0.0
    %1868 = vmatprep.mubr.f32.mxu0 0.0
    %1869 = vmatmul.mubr.f32.gmra.mrb[0].mxu0 %v1802
    %v1870 = vpop.f32.mrb[0].mxu0
    %v1871 = vadd.f32 0.0, %v1870
    %v1872 = vpop.f32.mrb[0].mxu0
    %1873 = vdwg.mxu0
    %v1874 = vadd.f32 %v1207, %v1871
    %v1875 = vtanh.pop %v1874
    %v1876 = vmul.f32 %v1875, %v89
    %v1877 = vadd.f32 %v1876, %v90
    %v1878 = vmul.f32 %v1877, %v1792
    %1880 = vrot.lane.b32.xlu0 %v1877, 64
    %v1881 = vpop.permute.xlu0 %1880
    %v1883 = vmul.f32 %v1877, %v1881
    %1885 = vrot.lane.b32.xlu0 %v1883, 32
    %v1886 = vpop.permute.xlu0 %1885
    %v1888 = vadd.f32 %v1878, %v1886
    %v1889 = vtanh.pop %v1888
    %1891 = vrot.lane.b32.xlu0 %v1889, 64
    %v1892 = vpop.permute.xlu0 %1891
    %v1894 = vmul.f32 %v1877, %v1892
    %1896 = vrot.lane.b32.xlu0 %v1894, 32
    %v1897 = vpop.permute.xlu0 %1896
    %v1898 = vsel %vm110, %v1897, 0
    %1900 = vmatprep.subr.mxu0 0.0
    %1901 = vmatpush1.msra.mxu0 %v1213
    %1902 = vmatprep.subr.mxu0 0.0
    %1903 = vmatpush1.msra.mxu0 %v1214
    %1904 = vmatprep.subr.mxu0 0.0
    %1905 = vmatpush1.msra.mxu0 %v1215
    %1906 = vmatprep.subr.mxu0 0.0
    %1907 = vmatpush1.msra.mxu0 %v1216
    %1908 = vmatprep.subr.mxu0 0.0
    %1909 = vmatpush1.msra.mxu0 0.0
    %1910 = vmatprep.subr.mxu0 0.0
    %1911 = vmatpush1.msra.mxu0 0.0
    %1912 = vmatprep.subr.mxu0 0.0
    %1913 = vmatpush1.msra.mxu0 0.0
    %1914 = vmatprep.subr.mxu0 0.0
    %1915 = vmatpush1.msra.mxu0 0.0
    %1916 = vmatprep.subr.mxu0 0.0
    %1917 = vmatpush1.msra.mxu0 0.0
    %1918 = vmatprep.subr.mxu0 0.0
    %1919 = vmatpush1.msra.mxu0 0.0
    %1920 = vmatprep.subr.mxu0 0.0
    %1921 = vmatpush1.msra.mxu0 0.0
    %1922 = vmatprep.subr.mxu0 0.0
    %1923 = vmatpush1.msra.mxu0 0.0
    %1924 = vmatprep.subr.mxu0 0.0
    %1925 = vmatpush1.msra.mxu0 0.0
    %1926 = vmatprep.subr.mxu0 0.0
    %1927 = vmatpush1.msra.mxu0 0.0
    %1928 = vmatprep.subr.mxu0 0.0
    %1929 = vmatpush1.msra.mxu0 0.0
    %1930 = vmatprep.subr.mxu0 0.0
    %1931 = vmatpush1.msra.mxu0 0.0
    %1932 = vmatprep.subr.mxu0 0.0
    %1933 = vmatpush1.msra.mxu0 0.0
    %1934 = vmatprep.subr.mxu0 0.0
    %1935 = vmatpush1.msra.mxu0 0.0
    %1936 = vmatprep.subr.mxu0 0.0
    %1937 = vmatpush1.msra.mxu0 0.0
    %1938 = vmatprep.subr.mxu0 0.0
    %1939 = vmatpush1.msra.mxu0 0.0
    %1940 = vmatprep.subr.mxu0 0.0
    %1941 = vmatpush1.msra.mxu0 0.0
    %1942 = vmatprep.subr.mxu0 0.0
    %1943 = vmatpush1.msra.mxu0 0.0
    %1944 = vmatprep.subr.mxu0 0.0
    %1945 = vmatpush1.msra.mxu0 0.0
    %1946 = vmatprep.subr.mxu0 0.0
    %1947 = vmatpush1.msra.mxu0 0.0
    %1948 = vmatprep.subr.mxu0 0.0
    %1949 = vmatpush1.msra.mxu0 0.0
    %1950 = vmatprep.subr.mxu0 0.0
    %1951 = vmatpush1.msra.mxu0 0.0
    %1952 = vmatprep.subr.mxu0 0.0
    %1953 = vmatpush1.msra.mxu0 0.0
    %1954 = vmatprep.subr.mxu0 0.0
    %1955 = vmatpush1.msra.mxu0 0.0
    %1956 = vmatprep.subr.mxu0 0.0
    %1957 = vmatpush1.msra.mxu0 0.0
    %1958 = vmatprep.subr.mxu0 0.0
    %1959 = vmatpush1.msra.mxu0 0.0
    %1960 = vmatprep.subr.mxu0 0.0
    %1961 = vmatpush1.msra.mxu0 0.0
    %1962 = vmatprep.subr.mxu0 0.0
    %1963 = vmatpush1.msra.mxu0 0.0
    %1964 = vmatprep.mubr.f32.mxu0 0.0
    %1965 = vmatmul.mubr.f32.gmra.mrb[0].mxu0 %v1898
    %v1966 = vpop.f32.mrb[0].mxu0
    %v1967 = vadd.f32 0.0, %v1966
    %v1968 = vpop.f32.mrb[0].mxu0
    %1969 = vdwg.mxu0
    %v1970 = vadd.f32 %v1208, %v1967
    %v1971 = vtanh.pop %v1970
    %v1972 = vmul.f32 %v1971, %v89
    %v1973 = vadd.f32 %v1972, %v90
    %v1974 = vmul.f32 %v1973, %v1888
    %1976 = vrot.lane.b32.xlu0 %v1973, 64
    %v1977 = vpop.permute.xlu0 %1976
    %v1979 = vmul.f32 %v1973, %v1977
    %1981 = vrot.lane.b32.xlu0 %v1979, 32
    %v1982 = vpop.permute.xlu0 %1981
    %v1984 = vadd.f32 %v1974, %v1982
    %v1985 = vtanh.pop %v1984
    %1987 = vrot.lane.b32.xlu0 %v1985, 64
    %v1988 = vpop.permute.xlu0 %1987
    %v1990 = vmul.f32 %v1973, %v1988
    %1992 = vrot.lane.b32.xlu0 %v1990, 32
    %v1993 = vpop.permute.xlu0 %1992
    %s1995 = scalar_lea.vmem [#allocation10], 8
    %1996 = vst.msk [vmem:[%s1995] sm:$0xff] %vm110, %v1993
    %1998 = vrot.lane.b32.xlu0 %v1984, 96
    %v1999 = vpop.permute.xlu0 %1998
    %s2001 = scalar_lea.vmem [#allocation12], 8
    %2002 = vst.msk [vmem:[%s2001] sm:$0xff] %vm110, %v1999
    %v2003 = vld [vmem:[#allocation8] sm:$0xff]
    %v2004 = vld [vmem:[#allocation8 + $0x8] sm:$0xff]
    %v2005 = vld [vmem:[#allocation8 + $0x10] sm:$0xff]
    %v2006 = vld [vmem:[#allocation8 + $0x18] sm:$0xff]
    %v2007 = vld [vmem:[%s10] sm:$0x1]
    %v2009 = vlaneseq
    %v2010 = vshrl.u32 %v2009, 7
    %v2011 = vsub.s32 0, %v2010
    %v2012 = vrot.slane %v2007, %v2011
    %v2014 = vsel %vm110, %v1993, 0
    %2016 = vmatprep.subr.mxu0 0.0
    %2017 = vmatpush1.msra.mxu0 %v2003
    %2018 = vmatprep.subr.mxu0 0.0
    %2019 = vmatpush1.msra.mxu0 %v2004
    %2020 = vmatprep.subr.mxu0 0.0
    %2021 = vmatpush1.msra.mxu0 %v2005
    %2022 = vmatprep.subr.mxu0 0.0
    %2023 = vmatpush1.msra.mxu0 %v2006
    %2024 = vmatprep.subr.mxu0 0.0
    %2025 = vmatpush1.msra.mxu0 0.0
    %2026 = vmatprep.subr.mxu0 0.0
    %2027 = vmatpush1.msra.mxu0 0.0
    %2028 = vmatprep.subr.mxu0 0.0
    %2029 = vmatpush1.msra.mxu0 0.0
    %2030 = vmatprep.subr.mxu0 0.0
    %2031 = vmatpush1.msra.mxu0 0.0
    %2032 = vmatprep.subr.mxu0 0.0
    %2033 = vmatpush1.msra.mxu0 0.0
    %2034 = vmatprep.subr.mxu0 0.0
    %2035 = vmatpush1.msra.mxu0 0.0
    %2036 = vmatprep.subr.mxu0 0.0
    %2037 = vmatpush1.msra.mxu0 0.0
    %2038 = vmatprep.subr.mxu0 0.0
    %2039 = vmatpush1.msra.mxu0 0.0
    %2040 = vmatprep.subr.mxu0 0.0
    %2041 = vmatpush1.msra.mxu0 0.0
    %2042 = vmatprep.subr.mxu0 0.0
    %2043 = vmatpush1.msra.mxu0 0.0
    %2044 = vmatprep.subr.mxu0 0.0
    %2045 = vmatpush1.msra.mxu0 0.0
    %2046 = vmatprep.subr.mxu0 0.0
    %2047 = vmatpush1.msra.mxu0 0.0
    %2048 = vmatprep.subr.mxu0 0.0
    %2049 = vmatpush1.msra.mxu0 0.0
    %2050 = vmatprep.subr.mxu0 0.0
    %2051 = vmatpush1.msra.mxu0 0.0
    %2052 = vmatprep.subr.mxu0 0.0
    %2053 = vmatpush1.msra.mxu0 0.0
    %2054 = vmatprep.subr.mxu0 0.0
    %2055 = vmatpush1.msra.mxu0 0.0
    %2056 = vmatprep.subr.mxu0 0.0
    %2057 = vmatpush1.msra.mxu0 0.0
    %2058 = vmatprep.subr.mxu0 0.0
    %2059 = vmatpush1.msra.mxu0 0.0
    %2060 = vmatprep.subr.mxu0 0.0
    %2061 = vmatpush1.msra.mxu0 0.0
    %2062 = vmatprep.subr.mxu0 0.0
    %2063 = vmatpush1.msra.mxu0 0.0
    %2064 = vmatprep.subr.mxu0 0.0
    %2065 = vmatpush1.msra.mxu0 0.0
    %2066 = vmatprep.subr.mxu0 0.0
    %2067 = vmatpush1.msra.mxu0 0.0
    %2068 = vmatprep.subr.mxu0 0.0
    %2069 = vmatpush1.msra.mxu0 0.0
    %2070 = vmatprep.subr.mxu0 0.0
    %2071 = vmatpush1.msra.mxu0 0.0
    %2072 = vmatprep.subr.mxu0 0.0
    %2073 = vmatpush1.msra.mxu0 0.0
    %2074 = vmatprep.subr.mxu0 0.0
    %2075 = vmatpush1.msra.mxu0 0.0
    %2076 = vmatprep.subr.mxu0 0.0
    %2077 = vmatpush1.msra.mxu0 0.0
    %2078 = vmatprep.subr.mxu0 0.0
    %2079 = vmatpush1.msra.mxu0 0.0
    %2080 = vmatprep.mubr.f32.mxu0 0.0
    %2081 = vmatmul.mubr.f32.gmra.mrb[0].mxu0 %v2014
    %v2082 = vpop.f32.mrb[0].mxu0
    %v2083 = vadd.f32 %v2012, %v2082
    %v2084 = vpop.f32.mrb[0].mxu0
    %2085 = vdwg.mxu0
    %vm2086 = vcmask 523264
    %2087 = vst.msk [vmem:[#allocation9] sm:$0xff] %vm2086, %v2083
    // Predicated region
    $region58: #{_fused_forward.1} parent=1 // pred_check
      _
    $region59: #{_fused_forward.1} parent=1 // pred_check_branch
      %2089 = sbr.rel (0) target = $region61
    $region60: #{_fused_forward.1} parent=1 // pred_region
      %s2091 = ssub.s32 128, 128
      %2092 = vsyncadd [#allocation5], %s2091
      %s2094 = sshll.u32 [#allocation9], 4
      %s2095 = int_to_ptr.vmem [resolvable:$true] %s2094
      %2097 = dma.vmem_to_hbm [thread:$0]  %s2095, 128, %s11, [#allocation5]
    $region61: #{_fused_forward.1} parent=1 // pred_fallthru
      _
    // Predicated region
    $region62: #{_fused_forward.1} parent=1 // pred_check
      _
    $region63: #{_fused_forward.1} parent=1 // pred_check_branch
      %2099 = sbr.rel (0) target = $region65
    $region64: #{_fused_forward.1} parent=1 // pred_region
      %s2101 = ssub.s32 256, 256
      %2102 = vsyncadd [#allocation11], %s2101
      %s2103 = sshll.u32 [#allocation10], 4
      %s2104 = int_to_ptr.vmem [resolvable:$true] %s2103
      %2109 = dma.vmem_to_hbm [thread:$0]  %s2104, 256, %s12, [#allocation11], 128, 128, 8
    $region65: #{_fused_forward.1} parent=1 // pred_fallthru
      _
    // Predicated region
    $region66: #{_fused_forward.1} parent=1 // pred_check
      _
    $region67: #{_fused_forward.1} parent=1 // pred_check_branch
      %2111 = sbr.rel (0) target = $region69
    $region68: #{_fused_forward.1} parent=1 // pred_region
      %s2113 = ssub.s32 256, 256
      %2114 = vsyncadd [#allocation11], %s2113
      %s2115 = sshll.u32 [#allocation12], 4
      %s2116 = int_to_ptr.vmem [resolvable:$true] %s2115
      %2121 = dma.vmem_to_hbm [thread:$0]  %s2116, 256, %s13, [#allocation11], 128, 128, 8
    $region69: #{_fused_forward.1} parent=1 // pred_fallthru
      _
    // Predicated region
    $region70: #{_fused_forward.1} parent=1 // pred_check
      _
    $region71: #{_fused_forward.1} parent=1 // pred_check_branch
      %2123 = sbr.rel (0) target = $region73
    $region72: #{_fused_forward.1} parent=1 // pred_region
      %2124 = dma.done [#allocation5], 128
    $region73: #{_fused_forward.1} parent=1 // pred_fallthru
      _
    // Predicated region
    $region74: #{_fused_forward.1} parent=1 // pred_check
      _
    $region75: #{_fused_forward.1} parent=1 // pred_check_branch
      %2126 = sbr.rel (0) target = $region77
    $region76: #{_fused_forward.1} parent=1 // pred_region
      %2127 = dma.done [#allocation11], 256
    $region77: #{_fused_forward.1} parent=1 // pred_fallthru
      _
    // Predicated region
    $region78: #{_fused_forward.1} parent=1 // pred_check
      _
    $region79: #{_fused_forward.1} parent=1 // pred_check_branch
      %2129 = sbr.rel (0) target = $region81
    $region80: #{_fused_forward.1} parent=1 // pred_region
      %2130 = dma.done [#allocation11], 256
    $region81: #{_fused_forward.1} parent=1 // pred_fallthru
      _
    %2131 = vsyncpa [#allocation4], 1
    %2132 = vsyncpa [#allocation7], 1
    %2133 = vsyncpa [#allocation5], 1
    %2134 = vsyncpa [#allocation11], 1

</llo_original>
